<compile_context>
chip_gen: v7x
topology: tpu7x:2x2x1
jax: 0.10.0
libtpu: 0.0.40
codegen_flags: <defaults>
</compile_context>

<pallas_src>
import functools
import math

import jax
import jax.numpy as jnp
from jax import lax
from jax.experimental import pallas as pl
from jax.experimental.pallas import tpu as pltpu


# ---------------------------------------------------------------------------
# Pallas kernel: one block of batch elements per grid step
# ---------------------------------------------------------------------------
def _dual_attn_kernel(q_ref, xe_ref, rel_ref, posr_ref,
                      we_ref, be_ref, wr_ref, br_ref, out_ref, *, scale):
    # q_ref   : (Bblk, E)      entity row 0 (+ pos_e[0])  -- the only consumed query
    # xe_ref  : (Bblk, Le, E)  full entity stream (x ++ mask token) + pos_e
    # rel_ref : (Bblk, E)      relation encoding (xr is NEVER materialized)
    # posr_ref: (Lr, E)        pos_r[:L]   (constant across the grid)
    # we_ref  : (3, E, E)  [Wq_e, Wk_e, Wv_e]   (in, out) layout
    # be_ref  : (3, 1, E)  [bq_e, bk_e, bv_e]
    # wr_ref  : (2, E, E)  [Wk_r, Wv_r]         (query_r dropped)
    # br_ref  : (2, 1, E)  [bk_r, bv_r]
    # out_ref : (Bblk, E)      output[:, 0] slab (lane-dense)
    f32 = jnp.float32

    xe = xe_ref[...]                    # (Bblk, Le, E)
    rel = rel_ref[...]                  # (Bblk, E)
    posr = posr_ref[...]                # (Lr, E)

    wq_e, wk_e, wv_e = we_ref[0], we_ref[1], we_ref[2]
    bq_e, bk_e, bv_e = be_ref[0], be_ref[1], be_ref[2]
    wk_r, wv_r = wr_ref[0], wr_ref[1]
    bk_r, bv_r = br_ref[0], br_ref[1]

    # Scaled query row (1/sqrt(E) folded here instead of into the score blocks).
    q0 = (jnp.dot(q_ref[...], wq_e, preferred_element_type=f32) + bq_e) * scale  # (Bblk, E)

    contract_last = (((1,), (1,)), ((), ()))   # contract last axes, no transpose

    # --- entity-stream scores: s_e[b,i] = <q0[b], xe[b,i] @ Wk_e + bk_e> ------
    qk = lax.dot_general(q0, wk_e, contract_last, preferred_element_type=f32)    # (Bblk, E)
    c_e = jnp.sum(q0 * bk_e, axis=-1, keepdims=True)                             # (Bblk, 1)
    s_e = jnp.sum(xe * qk[:, None, :], axis=-1) + c_e                            # (Bblk, Le)

    # --- relation-stream scores: xr[b,t] = rel[b] + posr[t] (factored) --------
    qkr = lax.dot_general(q0, wk_r, contract_last, preferred_element_type=f32)   # (Bblk, E)
    s_r = (jnp.sum(rel * qkr, axis=-1, keepdims=True)
           + lax.dot_general(qkr, posr, contract_last, preferred_element_type=f32)
           + jnp.sum(q0 * bk_r, axis=-1, keepdims=True))                         # (Bblk, Lr)

    # --- joint softmax over [s_e | s_r] without any concatenation -------------
    m = jnp.maximum(jnp.max(s_e, axis=-1, keepdims=True),
                    jnp.max(s_r, axis=-1, keepdims=True))                        # (Bblk, 1)
    p_e = jnp.exp(s_e - m)                                                       # (Bblk, Le)
    p_r = jnp.exp(s_r - m)                                                       # (Bblk, Lr)
    sp_e = jnp.sum(p_e, axis=-1, keepdims=True)                                  # (Bblk, 1)
    sp_r = jnp.sum(p_r, axis=-1, keepdims=True)                                  # (Bblk, 1)
    inv = pl.reciprocal(sp_e + sp_r, approx=True)                                # EUP slot

    # --- value contraction: reduce over the sequence first, then apply Wv ----
    z_e = jnp.sum(xe * p_e[:, :, None], axis=1)                                  # (Bblk, E)
    out_e = jnp.dot(z_e, wv_e, preferred_element_type=f32) + sp_e * bv_e         # (Bblk, E)

    z_r = sp_r * rel + jnp.dot(p_r, posr, preferred_element_type=f32)            # (Bblk, E)
    out_r = jnp.dot(z_r, wv_r, preferred_element_type=f32) + sp_r * bv_r         # (Bblk, E)

    out_ref[...] = (out_e + out_r) * inv


# ---------------------------------------------------------------------------
# Wrapper
# ---------------------------------------------------------------------------
def dual_heterogeneous_transformer(query_entity_encoding, relation_encoding,
                                   params, *, block_b=8):
    """JAX/Pallas forward matching DualHeterogeneousTransformer.forward (returns output[:, 0])."""
    x = query_entity_encoding
    if x.ndim == 2:
        x = x[:, None, :]
    B, L, E = x.shape
    if L > 99:
        x = x[:, -99:, :]
        L = 99

    Le, Lr = L + 1, L
    scale = 1.0 / math.sqrt(E)

    x = x.astype(jnp.float32)
    # Entity stream: append mask token, add positional encodings (cheap XLA glue).
    mask_tok = jnp.broadcast_to(params["mask_embedding"][0][None, None, :], (B, 1, E))
    xe = jnp.concatenate([x, mask_tok], axis=1) + params["pos_e"][:Le][None, :, :]
    # Only row 0 of the attention output is consumed -> only this query row is needed.
    q_in = x[:, 0, :] + params["pos_e"][0][None, :]
    rel = relation_encoding.astype(jnp.float32)
    posr = params["pos_r"][:Lr]

    # Pad batch to a multiple of the per-step batch block.
    Bblk = block_b
    B_pad = ((B + Bblk - 1) // Bblk) * Bblk
    if B_pad != B:
        pad = B_pad - B
        xe = jnp.pad(xe, ((0, pad), (0, 0), (0, 0)))
        q_in = jnp.pad(q_in, ((0, pad), (0, 0)))
        rel = jnp.pad(rel, ((0, pad), (0, 0)))

    # query_r is never used for row 0 -> ship only the key/value rows of w_r/b_r.
    w_e, b_e = params["w_e"], params["b_e"]
    w_r_kv, b_r_kv = params["w_r"][1:3], params["b_r"][1:3]

    kernel = functools.partial(_dual_attn_kernel, scale=scale)

    # NOTE: the weight/bias index_maps are constant, so Pallas only DMAs them once;
    # at very large E on v7x, single-buffering them (pipeline_mode) would halve
    # their VMEM residency further.
    out = pl.pallas_call(
        kernel,
        out_shape=jax.ShapeDtypeStruct((B_pad, E), jnp.float32),
        grid_spec=pltpu.PrefetchScalarGridSpec(
            num_scalar_prefetch=0,
            grid=(B_pad // Bblk,),
            in_specs=[
                pl.BlockSpec((Bblk, E), lambda b: (b, 0)),          # q_in
                pl.BlockSpec((Bblk, Le, E), lambda b: (b, 0, 0)),   # xe
                pl.BlockSpec((Bblk, E), lambda b: (b, 0)),          # relation encoding
                pl.BlockSpec((Lr, E), lambda b: (0, 0)),            # pos_r (shared)
                pl.BlockSpec((3, E, E), lambda b: (0, 0, 0)),       # w_e
                pl.BlockSpec((3, 1, E), lambda b: (0, 0, 0)),       # b_e
                pl.BlockSpec((2, E, E), lambda b: (0, 0, 0)),       # w_r (k, v)
                pl.BlockSpec((2, 1, E), lambda b: (0, 0, 0)),       # b_r (k, v)
            ],
            out_specs=pl.BlockSpec((Bblk, E), lambda b: (b, 0)),    # lane-dense slab
        ),
        compiler_params=pltpu.CompilerParams(
            dimension_semantics=("parallel",),
            vmem_limit_bytes=32 * 1024 * 1024,
        ),
    )(q_in, xe, rel, posr, w_e, b_e, w_r_kv, b_r_kv)
    return out[:B]


# ---------------------------------------------------------------------------
# Pure-JAX reference (mirrors the PyTorch forward literally)
# ---------------------------------------------------------------------------
def reference_forward(query_entity_encoding, relation_encoding, params):
    x = query_entity_encoding
    if x.ndim == 2:
        x = x[:, None, :]
    B, L, E = x.shape
    if L > 99:
        x = x[:, -99:, :]
        L = 99
    mask_tok = jnp.broadcast_to(params["mask_embedding"][0][None, None, :], (B, 1, E))
    xe = jnp.concatenate([x, mask_tok], axis=1) + params["pos_e"][: L + 1][None]
    xr = jnp.broadcast_to(relation_encoding[:, None, :], (B, L, E)) + params["pos_r"][:L][None]

    def lin(xx, w, b):
        return jnp.einsum("ble,eo->blo", xx, w) + b

    Qe = lin(xe, params["w_e"][0], params["b_e"][0])
    Ke = lin(xe, params["w_e"][1], params["b_e"][1])
    Ve = lin(xe, params["w_e"][2], params["b_e"][2])
    Qr = lin(xr, params["w_r"][0], params["b_r"][0])
    Kr = lin(xr, params["w_r"][1], params["b_r"][1])
    Vr = lin(xr, params["w_r"][2], params["b_r"][2])

    s = jnp.sqrt(jnp.float32(E))
    Aee = jnp.einsum("bqe,bke->bqk", Qe, Ke) / s
    Aer = jnp.einsum("bqe,bke->bqk", Qe, Kr) / s
    Are = jnp.einsum("bqe,bke->bqk", Qr, Ke) / s
    Arr = jnp.einsum("bqe,bke->bqk", Qr, Kr) / s
    A = jnp.concatenate(
        [jnp.concatenate([Aee, Aer], axis=2), jnp.concatenate([Are, Arr], axis=2)],
        axis=1)
    A = jax.nn.softmax(A, axis=2)
    out = jnp.einsum("bqk,bke->bqe", A, jnp.concatenate([Ve, Vr], axis=1))
    return out[:, 0]


# ---------------------------------------------------------------------------
def init_params(key, embedding_size):
    E = embedding_size
    ks = jax.random.split(key, 6)
    # weights stored in (in, out) layout == torch Linear weight transposed
    return {
        "mask_embedding": jax.random.normal(ks[0], (1, E), jnp.float32) * 0.1,
        "pos_e": jax.random.normal(ks[1], (100, E), jnp.float32) * 0.1,
        "pos_r": jax.random.normal(ks[2], (100, E), jnp.float32) * 0.1,
        "w_e": jax.random.normal(ks[3], (3, E, E), jnp.float32) * 0.1,
        "b_e": jax.random.normal(ks[4], (3, 1, E), jnp.float32) * 0.1,
        "w_r": jax.random.normal(ks[5], (3, E, E), jnp.float32) * 0.1,
        "b_r": jnp.zeros((3, 1, E), jnp.float32),
    }


if __name__ == "__main__":
    B, L, E = 2, 8, 32
    key = jax.random.PRNGKey(0)
    k_in, k_rel, k_par = jax.random.split(key, 3)

    query_entity_encoding = jax.random.normal(k_in, (B, L, E), jnp.float32)
    relation_encoding = jax.random.normal(k_rel, (B, E), jnp.float32)
    params = init_params(k_par, E)

    out = dual_heterogeneous_transformer(query_entity_encoding, relation_encoding, params)
    out = jax.block_until_ready(out)

    ref = reference_forward(query_entity_encoding, relation_encoding, params)
    assert out.shape == (B, E)
    # Tolerance covers the EUP approximate reciprocal used for the softmax denominator.
    assert jnp.allclose(out, ref, atol=2e-3, rtol=2e-3), "mismatch vs reference"
    print("KERNEL_OK")
</pallas_src>

<mosaic_0001>
module attributes {stable_mosaic.version = 11 : i64} {
  func.func @_dual_attn_kernel(%arg0: i32, %arg1: memref<8x32xf32, #tpu.memory_space<vmem>>, %arg2: memref<8x9x32xf32, #tpu.memory_space<vmem>>, %arg3: memref<8x32xf32, #tpu.memory_space<vmem>>, %arg4: memref<8x32xf32, #tpu.memory_space<vmem>>, %arg5: memref<3x32x32xf32, #tpu.memory_space<vmem>>, %arg6: memref<3x1x32xf32, #tpu.memory_space<vmem>>, %arg7: memref<2x32x32xf32, #tpu.memory_space<vmem>>, %arg8: memref<2x1x32xf32, #tpu.memory_space<vmem>>, %arg9: memref<8x32xf32, #tpu.memory_space<vmem>>) attributes {dimension_semantics = [#tpu.dimension_semantics<parallel>], iteration_bounds = array<i64: 1>, scalar_prefetch = 0 : i64, scratch_operands = 0 : i64, tpu.core_type = #tpu.core_type<tc>, window_params = [{transform_indices = @transform_0, window_bounds = array<i64: 8, 32>}, {transform_indices = @transform_1, window_bounds = array<i64: 8, 9, 32>}, {transform_indices = @transform_2, window_bounds = array<i64: 8, 32>}, {pipeline_mode = #tpu.pipeline_mode<synchronous>, transform_indices = @transform_3, window_bounds = array<i64: 8, 32>}, {pipeline_mode = #tpu.pipeline_mode<synchronous>, transform_indices = @transform_4, window_bounds = array<i64: 3, 32, 32>}, {pipeline_mode = #tpu.pipeline_mode<synchronous>, transform_indices = @transform_5, window_bounds = array<i64: 3, 1, 32>}, {pipeline_mode = #tpu.pipeline_mode<synchronous>, transform_indices = @transform_6, window_bounds = array<i64: 2, 32, 32>}, {pipeline_mode = #tpu.pipeline_mode<synchronous>, transform_indices = @transform_7, window_bounds = array<i64: 2, 1, 32>}, {transform_indices = @transform_8, window_bounds = array<i64: 8, 32>}]} {
    %c0 = arith.constant 0 : index
    %c0_0 = arith.constant 0 : index
    %c0_1 = arith.constant 0 : index
    %0 = vector.load %arg2[%c0, %c0_0, %c0_1] : memref<8x9x32xf32, #tpu.memory_space<vmem>>, vector<8x9x32xf32>
    %c0_2 = arith.constant 0 : index
    %c0_3 = arith.constant 0 : index
    %1 = vector.load %arg3[%c0_2, %c0_3] : memref<8x32xf32, #tpu.memory_space<vmem>>, vector<8x32xf32>
    %c0_4 = arith.constant 0 : index
    %c0_5 = arith.constant 0 : index
    %2 = vector.load %arg4[%c0_4, %c0_5] : memref<8x32xf32, #tpu.memory_space<vmem>>, vector<8x32xf32>
    %c0_6 = arith.constant 0 : index
    %c0_7 = arith.constant 0 : index
    %c0_8 = arith.constant 0 : index
    %3 = vector.load %arg5[%c0_6, %c0_7, %c0_8] : memref<3x32x32xf32, #tpu.memory_space<vmem>>, vector<1x32x32xf32>
    %4 = vector.shape_cast %3 : vector<1x32x32xf32> to vector<32x32xf32>
    %c1 = arith.constant 1 : index
    %c0_9 = arith.constant 0 : index
    %c0_10 = arith.constant 0 : index
    %5 = vector.load %arg5[%c1, %c0_9, %c0_10] : memref<3x32x32xf32, #tpu.memory_space<vmem>>, vector<1x32x32xf32>
    %6 = vector.shape_cast %5 : vector<1x32x32xf32> to vector<32x32xf32>
    %c2 = arith.constant 2 : index
    %c0_11 = arith.constant 0 : index
    %c0_12 = arith.constant 0 : index
    %7 = vector.load %arg5[%c2, %c0_11, %c0_12] : memref<3x32x32xf32, #tpu.memory_space<vmem>>, vector<1x32x32xf32>
    %8 = vector.shape_cast %7 : vector<1x32x32xf32> to vector<32x32xf32>
    %c0_13 = arith.constant 0 : index
    %c0_14 = arith.constant 0 : index
    %c0_15 = arith.constant 0 : index
    %9 = vector.load %arg6[%c0_13, %c0_14, %c0_15] : memref<3x1x32xf32, #tpu.memory_space<vmem>>, vector<1x1x32xf32>
    %10 = vector.shape_cast %9 : vector<1x1x32xf32> to vector<1x32xf32>
    %c1_16 = arith.constant 1 : index
    %c0_17 = arith.constant 0 : index
    %c0_18 = arith.constant 0 : index
    %11 = vector.load %arg6[%c1_16, %c0_17, %c0_18] : memref<3x1x32xf32, #tpu.memory_space<vmem>>, vector<1x1x32xf32>
    %12 = vector.shape_cast %11 : vector<1x1x32xf32> to vector<1x32xf32>
    %c2_19 = arith.constant 2 : index
    %c0_20 = arith.constant 0 : index
    %c0_21 = arith.constant 0 : index
    %13 = vector.load %arg6[%c2_19, %c0_20, %c0_21] : memref<3x1x32xf32, #tpu.memory_space<vmem>>, vector<1x1x32xf32>
    %14 = vector.shape_cast %13 : vector<1x1x32xf32> to vector<1x32xf32>
    %c0_22 = arith.constant 0 : index
    %c0_23 = arith.constant 0 : index
    %c0_24 = arith.constant 0 : index
    %15 = vector.load %arg7[%c0_22, %c0_23, %c0_24] : memref<2x32x32xf32, #tpu.memory_space<vmem>>, vector<1x32x32xf32>
    %16 = vector.shape_cast %15 : vector<1x32x32xf32> to vector<32x32xf32>
    %c1_25 = arith.constant 1 : index
    %c0_26 = arith.constant 0 : index
    %c0_27 = arith.constant 0 : index
    %17 = vector.load %arg7[%c1_25, %c0_26, %c0_27] : memref<2x32x32xf32, #tpu.memory_space<vmem>>, vector<1x32x32xf32>
    %18 = vector.shape_cast %17 : vector<1x32x32xf32> to vector<32x32xf32>
    %c0_28 = arith.constant 0 : index
    %c0_29 = arith.constant 0 : index
    %c0_30 = arith.constant 0 : index
    %19 = vector.load %arg8[%c0_28, %c0_29, %c0_30] : memref<2x1x32xf32, #tpu.memory_space<vmem>>, vector<1x1x32xf32>
    %20 = vector.shape_cast %19 : vector<1x1x32xf32> to vector<1x32xf32>
    %c1_31 = arith.constant 1 : index
    %c0_32 = arith.constant 0 : index
    %c0_33 = arith.constant 0 : index
    %21 = vector.load %arg8[%c1_31, %c0_32, %c0_33] : memref<2x1x32xf32, #tpu.memory_space<vmem>>, vector<1x1x32xf32>
    %22 = vector.shape_cast %21 : vector<1x1x32xf32> to vector<1x32xf32>
    %c0_34 = arith.constant 0 : index
    %c0_35 = arith.constant 0 : index
    %23 = vector.load %arg1[%c0_34, %c0_35] : memref<8x32xf32, #tpu.memory_space<vmem>>, vector<8x32xf32>
    %cst = arith.constant dense<0.000000e+00> : vector<8x32xf32>
    %24 = tpu.matmul %23, %4, %cst {dimension_numbers = #tpu.dot_dimension_numbers<[1], [0], [0], [1], [0, 0, 1, 1], [], []>} : vector<8x32xf32>, vector<32x32xf32>, vector<8x32xf32> -> vector<8x32xf32>
    %25 = vector.broadcast %10 : vector<1x32xf32> to vector<8x32xf32>
    %26 = arith.addf %24, %25 : vector<8x32xf32>
    %cst_36 = arith.constant 0.176776692 : f32
    %27 = vector.broadcast %cst_36 : f32 to vector<8x32xf32>
    %28 = arith.mulf %26, %27 : vector<8x32xf32>
    %cst_37 = arith.constant dense<0.000000e+00> : vector<8x32xf32>
    %29 = tpu.matmul %28, %6, %cst_37 {dimension_numbers = #tpu.dot_dimension_numbers<[1], [1], [0], [0], [0, 0, 1, 0], [], []>} : vector<8x32xf32>, vector<32x32xf32>, vector<8x32xf32> -> vector<8x32xf32>
    %30 = vector.broadcast %12 : vector<1x32xf32> to vector<8x32xf32>
    %31 = arith.mulf %28, %30 : vector<8x32xf32>
    %cst_38 = arith.constant dense<0.000000e+00> : vector<8xf32>
    %32 = vector.multi_reduction <add>, %31, %cst_38 [1] : vector<8x32xf32> to vector<8xf32>
    %33 = vector.shape_cast %32 : vector<8xf32> to vector<8x1xf32>
    %34 = vector.shape_cast %29 : vector<8x32xf32> to vector<8x1x32xf32>
    %35 = vector.broadcast %34 : vector<8x1x32xf32> to vector<8x9x32xf32>
    %36 = arith.mulf %0, %35 : vector<8x9x32xf32>
    %cst_39 = arith.constant dense<0.000000e+00> : vector<8x9xf32>
    %37 = vector.multi_reduction <add>, %36, %cst_39 [2] : vector<8x9x32xf32> to vector<8x9xf32>
    %38 = vector.broadcast %33 : vector<8x1xf32> to vector<8x9xf32>
    %39 = arith.addf %37, %38 : vector<8x9xf32>
    %cst_40 = arith.constant dense<0.000000e+00> : vector<8x32xf32>
    %40 = tpu.matmul %28, %16, %cst_40 {dimension_numbers = #tpu.dot_dimension_numbers<[1], [1], [0], [0], [0, 0, 1, 0], [], []>} : vector<8x32xf32>, vector<32x32xf32>, vector<8x32xf32> -> vector<8x32xf32>
    %41 = arith.mulf %1, %40 : vector<8x32xf32>
    %cst_41 = arith.constant dense<0.000000e+00> : vector<8xf32>
    %42 = vector.multi_reduction <add>, %41, %cst_41 [1] : vector<8x32xf32> to vector<8xf32>
    %43 = vector.shape_cast %42 : vector<8xf32> to vector<8x1xf32>
    %cst_42 = arith.constant dense<0.000000e+00> : vector<8x8xf32>
    %44 = tpu.matmul %40, %2, %cst_42 {dimension_numbers = #tpu.dot_dimension_numbers<[1], [1], [0], [0], [0, 0, 1, 0], [], []>} : vector<8x32xf32>, vector<8x32xf32>, vector<8x8xf32> -> vector<8x8xf32>
    %45 = vector.broadcast %43 : vector<8x1xf32> to vector<8x8xf32>
    %46 = arith.addf %45, %44 : vector<8x8xf32>
    %47 = vector.broadcast %20 : vector<1x32xf32> to vector<8x32xf32>
    %48 = arith.mulf %28, %47 : vector<8x32xf32>
    %cst_43 = arith.constant dense<0.000000e+00> : vector<8xf32>
    %49 = vector.multi_reduction <add>, %48, %cst_43 [1] : vector<8x32xf32> to vector<8xf32>
    %50 = vector.shape_cast %49 : vector<8xf32> to vector<8x1xf32>
    %51 = vector.broadcast %50 : vector<8x1xf32> to vector<8x8xf32>
    %52 = arith.addf %46, %51 : vector<8x8xf32>
    %cst_44 = arith.constant dense<0xFF800000> : vector<8xf32>
    %53 = vector.multi_reduction <maximumf>, %39, %cst_44 [1] : vector<8x9xf32> to vector<8xf32>
    %54 = vector.shape_cast %53 : vector<8xf32> to vector<8x1xf32>
    %cst_45 = arith.constant dense<0xFF800000> : vector<8xf32>
    %55 = vector.multi_reduction <maximumf>, %52, %cst_45 [1] : vector<8x8xf32> to vector<8xf32>
    %56 = vector.shape_cast %55 : vector<8xf32> to vector<8x1xf32>
    %57 = arith.maximumf %54, %56 : vector<8x1xf32>
    %58 = vector.broadcast %57 : vector<8x1xf32> to vector<8x9xf32>
    %59 = arith.subf %39, %58 : vector<8x9xf32>
    %60 = math.exp %59 : vector<8x9xf32>
    %61 = vector.broadcast %57 : vector<8x1xf32> to vector<8x8xf32>
    %62 = arith.subf %52, %61 : vector<8x8xf32>
    %63 = math.exp %62 : vector<8x8xf32>
    %cst_46 = arith.constant dense<0.000000e+00> : vector<8xf32>
    %64 = vector.multi_reduction <add>, %60, %cst_46 [1] : vector<8x9xf32> to vector<8xf32>
    %65 = vector.shape_cast %64 : vector<8xf32> to vector<8x1xf32>
    %cst_47 = arith.constant dense<0.000000e+00> : vector<8xf32>
    %66 = vector.multi_reduction <add>, %63, %cst_47 [1] : vector<8x8xf32> to vector<8xf32>
    %67 = vector.shape_cast %66 : vector<8xf32> to vector<8x1xf32>
    %68 = arith.addf %65, %67 : vector<8x1xf32>
    %69 = tpu.reciprocal %68 {approx = true} : vector<8x1xf32> -> vector<8x1xf32>
    %70 = vector.shape_cast %60 : vector<8x9xf32> to vector<8x9x1xf32>
    %71 = vector.broadcast %70 : vector<8x9x1xf32> to vector<8x9x32xf32>
    %72 = arith.mulf %0, %71 : vector<8x9x32xf32>
    %cst_48 = arith.constant dense<0.000000e+00> : vector<8x32xf32>
    %73 = vector.multi_reduction <add>, %72, %cst_48 [1] : vector<8x9x32xf32> to vector<8x32xf32>
    %cst_49 = arith.constant dense<0.000000e+00> : vector<8x32xf32>
    %74 = tpu.matmul %73, %8, %cst_49 {dimension_numbers = #tpu.dot_dimension_numbers<[1], [0], [0], [1], [0, 0, 1, 1], [], []>} : vector<8x32xf32>, vector<32x32xf32>, vector<8x32xf32> -> vector<8x32xf32>
    %75 = vector.broadcast %65 : vector<8x1xf32> to vector<8x32xf32>
    %76 = vector.broadcast %14 : vector<1x32xf32> to vector<8x32xf32>
    %77 = arith.mulf %75, %76 : vector<8x32xf32>
    %78 = arith.addf %74, %77 : vector<8x32xf32>
    %79 = vector.broadcast %67 : vector<8x1xf32> to vector<8x32xf32>
    %80 = arith.mulf %79, %1 : vector<8x32xf32>
    %cst_50 = arith.constant dense<0.000000e+00> : vector<8x32xf32>
    %81 = tpu.matmul %63, %2, %cst_50 {dimension_numbers = #tpu.dot_dimension_numbers<[1], [0], [0], [1], [0, 0, 1, 1], [], []>} : vector<8x8xf32>, vector<8x32xf32>, vector<8x32xf32> -> vector<8x32xf32>
    %82 = arith.addf %80, %81 : vector<8x32xf32>
    %cst_51 = arith.constant dense<0.000000e+00> : vector<8x32xf32>
    %83 = tpu.matmul %82, %18, %cst_51 {dimension_numbers = #tpu.dot_dimension_numbers<[1], [0], [0], [1], [0, 0, 1, 1], [], []>} : vector<8x32xf32>, vector<32x32xf32>, vector<8x32xf32> -> vector<8x32xf32>
    %84 = vector.broadcast %67 : vector<8x1xf32> to vector<8x32xf32>
    %85 = vector.broadcast %22 : vector<1x32xf32> to vector<8x32xf32>
    %86 = arith.mulf %84, %85 : vector<8x32xf32>
    %87 = arith.addf %83, %86 : vector<8x32xf32>
    %88 = arith.addf %78, %87 : vector<8x32xf32>
    %89 = vector.broadcast %69 : vector<8x1xf32> to vector<8x32xf32>
    %90 = arith.mulf %88, %89 : vector<8x32xf32>
    %c0_52 = arith.constant 0 : index
    %c0_53 = arith.constant 0 : index
    %91 = vector.load %arg9[%c0_52, %c0_53] : memref<8x32xf32, #tpu.memory_space<vmem>>, vector<8x32xf32>
    tpu.vector_store %arg9[%c0_52, %c0_53], %90 {strides = array<i32>} : memref<8x32xf32, #tpu.memory_space<vmem>>, vector<8x32xf32>,
    return
  }
  func.func @transform_0(%arg0: i32) -> (i32, i32) {
    %c0_i32 = arith.constant 0 : i32
    %c0_i32_0 = arith.constant 0 : i32
    return %arg0, %c0_i32 : i32, i32
  }
  func.func @transform_1(%arg0: i32) -> (i32, i32, i32) {
    %c0_i32 = arith.constant 0 : i32
    %c0_i32_0 = arith.constant 0 : i32
    %c0_i32_1 = arith.constant 0 : i32
    return %arg0, %c0_i32, %c0_i32_0 : i32, i32, i32
  }
  func.func @transform_2(%arg0: i32) -> (i32, i32) {
    %c0_i32 = arith.constant 0 : i32
    %c0_i32_0 = arith.constant 0 : i32
    return %arg0, %c0_i32 : i32, i32
  }
  func.func @transform_3(%arg0: i32) -> (i32, i32) {
    %c0_i32 = arith.constant 0 : i32
    %c0_i32_0 = arith.constant 0 : i32
    %c0_i32_1 = arith.constant 0 : i32
    return %c0_i32, %c0_i32_0 : i32, i32
  }
  func.func @transform_4(%arg0: i32) -> (i32, i32, i32) {
    %c0_i32 = arith.constant 0 : i32
    %c0_i32_0 = arith.constant 0 : i32
    %c0_i32_1 = arith.constant 0 : i32
    %c0_i32_2 = arith.constant 0 : i32
    return %c0_i32, %c0_i32_0, %c0_i32_1 : i32, i32, i32
  }
  func.func @transform_5(%arg0: i32) -> (i32, i32, i32) {
    %c0_i32 = arith.constant 0 : i32
    %c0_i32_0 = arith.constant 0 : i32
    %c0_i32_1 = arith.constant 0 : i32
    %c0_i32_2 = arith.constant 0 : i32
    return %c0_i32, %c0_i32_0, %c0_i32_1 : i32, i32, i32
  }
  func.func @transform_6(%arg0: i32) -> (i32, i32, i32) {
    %c0_i32 = arith.constant 0 : i32
    %c0_i32_0 = arith.constant 0 : i32
    %c0_i32_1 = arith.constant 0 : i32
    %c0_i32_2 = arith.constant 0 : i32
    return %c0_i32, %c0_i32_0, %c0_i32_1 : i32, i32, i32
  }
  func.func @transform_7(%arg0: i32) -> (i32, i32, i32) {
    %c0_i32 = arith.constant 0 : i32
    %c0_i32_0 = arith.constant 0 : i32
    %c0_i32_1 = arith.constant 0 : i32
    %c0_i32_2 = arith.constant 0 : i32
    return %c0_i32, %c0_i32_0, %c0_i32_1 : i32, i32, i32
  }
  func.func @transform_8(%arg0: i32) -> (i32, i32) {
    %c0_i32 = arith.constant 0 : i32
    %c0_i32_0 = arith.constant 0 : i32
    return %arg0, %c0_i32 : i32, i32
  }
}

</mosaic_0001>

<llo_original>
// kernel: tpu_custom_call.1
$region0: #{tpu_custom_call.1}
  #allocation0 [shape = 'u32[]', space=smem, size = 0x4, offset = 0x4, fixed_abs, tag = 'smem constant byte address 0x4 - core index']
  #allocation1 [shape = 'u32[144,128]{1,0:T(1,128)}', space=vmem, size = 0x12000, scoped, tag = 'internal scratch']
  %s0 = inlined_call_operand.vmem [shape: f32[8,32], index: 0, kind: input, shape index: {}]
  %s1 = inlined_call_operand.vmem [shape: f32[8,9,32], index: 1, kind: input, shape index: {}]
  %s2 = inlined_call_operand.vmem [shape: f32[8,32], index: 2, kind: input, shape index: {}]
  %s3 = inlined_call_operand.vmem [shape: f32[8,32], index: 3, kind: input, shape index: {}]
  %s4 = inlined_call_operand.vmem [shape: f32[3,32,32], index: 4, kind: input, shape index: {}]
  %s5 = inlined_call_operand.vmem [shape: f32[3,1,32], index: 5, kind: input, shape index: {}]
  %s6 = inlined_call_operand.vmem [shape: f32[2,32,32], index: 6, kind: input, shape index: {}]
  %s7 = inlined_call_operand.vmem [shape: f32[2,1,32], index: 7, kind: input, shape index: {}]
  %s8 = inlined_call_operand.hbm [shape: f32[8,32], index: 8, kind: output, shape index: {}]
  %s9 = sld [smem:[#allocation0]]
  $region42: #{tpu_custom_call.1} parent=0
    _
  %s11 = ssub.s32 1, %s9
  %s12 = scalar_select 0, %s11, %s9
  $region1: #{tpu_custom_call.1} parent=0
    #allocation2 [shape = 'u8[4096]{0}', space=vmem, size = 0x1000, scoped, tag = 'output window, operand 0, single buffered']
    #allocation3 [shape = 's32[1]{0}', space=sflag, size = 0x4, scoped, tag = 'scoped memory for tpu_custom_call.1']
    %13 = vsyncpa [#allocation3], 0
    // Predicated region
    $region2: #{tpu_custom_call.1} parent=1 // pred_check
      _
    $region3: #{tpu_custom_call.1} parent=1 // pred_check_branch
      %15 = sbr.rel (0) target = $region5
    $region4: #{tpu_custom_call.1} parent=1 // pred_region
      _
    $region5: #{tpu_custom_call.1} parent=1 // pred_fallthru
      _
    // Predicated region
    $region6: #{tpu_custom_call.1} parent=1 // pred_check
      _
    $region7: #{tpu_custom_call.1} parent=1 // pred_check_branch
      %17 = sbr.rel (0) target = $region9
    $region8: #{tpu_custom_call.1} parent=1 // pred_region
      _
    $region9: #{tpu_custom_call.1} parent=1 // pred_fallthru
      _
    // Predicated region
    $region10: #{tpu_custom_call.1} parent=1 // pred_check
      _
    $region11: #{tpu_custom_call.1} parent=1 // pred_check_branch
      %19 = sbr.rel (0) target = $region13
    $region12: #{tpu_custom_call.1} parent=1 // pred_region
      _
    $region13: #{tpu_custom_call.1} parent=1 // pred_fallthru
      _
    // Predicated region
    $region14: #{tpu_custom_call.1} parent=1 // pred_check
      _
    $region15: #{tpu_custom_call.1} parent=1 // pred_check_branch
      %21 = sbr.rel (0) target = $region17
    $region16: #{tpu_custom_call.1} parent=1 // pred_region
      _
    $region17: #{tpu_custom_call.1} parent=1 // pred_fallthru
      _
    // Predicated region
    $region18: #{tpu_custom_call.1} parent=1 // pred_check
      _
    $region19: #{tpu_custom_call.1} parent=1 // pred_check_branch
      %23 = sbr.rel (0) target = $region21
    $region20: #{tpu_custom_call.1} parent=1 // pred_region
      _
    $region21: #{tpu_custom_call.1} parent=1 // pred_fallthru
      _
    // Predicated region
    $region22: #{tpu_custom_call.1} parent=1 // pred_check
      _
    $region23: #{tpu_custom_call.1} parent=1 // pred_check_branch
      %25 = sbr.rel (0) target = $region25
    $region24: #{tpu_custom_call.1} parent=1 // pred_region
      _
    $region25: #{tpu_custom_call.1} parent=1 // pred_fallthru
      _
    // Predicated region
    $region26: #{tpu_custom_call.1} parent=1 // pred_check
      _
    $region27: #{tpu_custom_call.1} parent=1 // pred_check_branch
      %27 = sbr.rel (0) target = $region29
    $region28: #{tpu_custom_call.1} parent=1 // pred_region
      _
    $region29: #{tpu_custom_call.1} parent=1 // pred_fallthru
      _
    // Predicated region
    $region30: #{tpu_custom_call.1} parent=1 // pred_check
      _
    $region31: #{tpu_custom_call.1} parent=1 // pred_check_branch
      %29 = sbr.rel (0) target = $region33
    $region32: #{tpu_custom_call.1} parent=1 // pred_region
      _
    $region33: #{tpu_custom_call.1} parent=1 // pred_fallthru
      _
    %v30 = vld [vmem:[%s1] sm:$0xff]
    %v31 = vld [vmem:[%s1 + $0x8] sm:$0x1]
    %v32 = vld [vmem:[%s1 + $0x10] sm:$0xff]
    %v33 = vld [vmem:[%s1 + $0x18] sm:$0x1]
    %v34 = vld [vmem:[%s1 + $0x20] sm:$0xff]
    %v35 = vld [vmem:[%s1 + $0x28] sm:$0x1]
    %v36 = vld [vmem:[%s1 + $0x30] sm:$0xff]
    %v37 = vld [vmem:[%s1 + $0x38] sm:$0x1]
    %v38 = vld [vmem:[%s1 + $0x40] sm:$0xff]
    %v39 = vld [vmem:[%s1 + $0x48] sm:$0x1]
    %v40 = vld [vmem:[%s1 + $0x50] sm:$0xff]
    %v41 = vld [vmem:[%s1 + $0x58] sm:$0x1]
    %v42 = vld [vmem:[%s1 + $0x60] sm:$0xff]
    %v43 = vld [vmem:[%s1 + $0x68] sm:$0x1]
    %v44 = vld [vmem:[%s1 + $0x70] sm:$0xff]
    %v45 = vld [vmem:[%s1 + $0x78] sm:$0x1]
    %v46 = vld [vmem:[%s2] sm:$0xff]
    %v47 = vld [vmem:[%s3] sm:$0xff]
    %v48 = vld [vmem:[%s4] sm:$0xff]
    %v49 = vld [vmem:[%s4 + $0x8] sm:$0xff]
    %v50 = vld [vmem:[%s4 + $0x10] sm:$0xff]
    %v51 = vld [vmem:[%s4 + $0x18] sm:$0xff]
    %s52 = scalar_lea.vmem %s4, 32
    %v53 = vld [vmem:[%s52] sm:$0xff]
    %v54 = vld [vmem:[%s52 + $0x8] sm:$0xff]
    %v55 = vld [vmem:[%s52 + $0x10] sm:$0xff]
    %v56 = vld [vmem:[%s52 + $0x18] sm:$0xff]
    %s57 = scalar_lea.vmem %s4, 64
    %v58 = vld [vmem:[%s57] sm:$0xff]
    %v59 = vld [vmem:[%s57 + $0x8] sm:$0xff]
    %v60 = vld [vmem:[%s57 + $0x10] sm:$0xff]
    %v61 = vld [vmem:[%s57 + $0x18] sm:$0xff]
    %v62 = vld [vmem:[%s5] sm:$0x1]
    %s63 = scalar_lea.vmem %s5, 1
    %v64 = vld [vmem:[%s63] sm:$0x1]
    %s65 = scalar_lea.vmem %s5, 2
    %v66 = vld [vmem:[%s65] sm:$0x1]
    %v67 = vld [vmem:[%s6] sm:$0xff]
    %v68 = vld [vmem:[%s6 + $0x8] sm:$0xff]
    %v69 = vld [vmem:[%s6 + $0x10] sm:$0xff]
    %v70 = vld [vmem:[%s6 + $0x18] sm:$0xff]
    %s71 = scalar_lea.vmem %s6, 32
    %v72 = vld [vmem:[%s71] sm:$0xff]
    %v73 = vld [vmem:[%s71 + $0x8] sm:$0xff]
    %v74 = vld [vmem:[%s71 + $0x10] sm:$0xff]
    %v75 = vld [vmem:[%s71 + $0x18] sm:$0xff]
    %v76 = vld [vmem:[%s7] sm:$0x1]
    %s77 = scalar_lea.vmem %s7, 1
    %v78 = vld [vmem:[%s77] sm:$0x1]
    %v79 = vld [vmem:[%s0] sm:$0xff]
    %v81 = vlaneseq
    %v82 = vshrl.u32 %v81, 7
    %v83 = vsub.s32 0, %v82
    %v84 = vrot.slane %v62, %v83
    %vm86 = vcmask 261120
    %v88 = vsel %vm86, %v79, 0
    %90 = vmatprep.subr.mxu0 0.0
    %91 = vmatpush1.msra.mxu0 %v48
    %92 = vmatprep.subr.mxu0 0.0
    %93 = vmatpush1.msra.mxu0 %v49
    %94 = vmatprep.subr.mxu0 0.0
    %95 = vmatpush1.msra.mxu0 %v50
    %96 = vmatprep.subr.mxu0 0.0
    %97 = vmatpush1.msra.mxu0 %v51
    %98 = vmatprep.subr.mxu0 0.0
    %99 = vmatpush1.msra.mxu0 0.0
    %100 = vmatprep.subr.mxu0 0.0
    %101 = vmatpush1.msra.mxu0 0.0
    %102 = vmatprep.subr.mxu0 0.0
    %103 = vmatpush1.msra.mxu0 0.0
    %104 = vmatprep.subr.mxu0 0.0
    %105 = vmatpush1.msra.mxu0 0.0
    %106 = vmatprep.subr.mxu0 0.0
    %107 = vmatpush1.msra.mxu0 0.0
    %108 = vmatprep.subr.mxu0 0.0
    %109 = vmatpush1.msra.mxu0 0.0
    %110 = vmatprep.subr.mxu0 0.0
    %111 = vmatpush1.msra.mxu0 0.0
    %112 = vmatprep.subr.mxu0 0.0
    %113 = vmatpush1.msra.mxu0 0.0
    %114 = vmatprep.subr.mxu0 0.0
    %115 = vmatpush1.msra.mxu0 0.0
    %116 = vmatprep.subr.mxu0 0.0
    %117 = vmatpush1.msra.mxu0 0.0
    %118 = vmatprep.subr.mxu0 0.0
    %119 = vmatpush1.msra.mxu0 0.0
    %120 = vmatprep.subr.mxu0 0.0
    %121 = vmatpush1.msra.mxu0 0.0
    %122 = vmatprep.subr.mxu0 0.0
    %123 = vmatpush1.msra.mxu0 0.0
    %124 = vmatprep.subr.mxu0 0.0
    %125 = vmatpush1.msra.mxu0 0.0
    %126 = vmatprep.subr.mxu0 0.0
    %127 = vmatpush1.msra.mxu0 0.0
    %128 = vmatprep.subr.mxu0 0.0
    %129 = vmatpush1.msra.mxu0 0.0
    %130 = vmatprep.subr.mxu0 0.0
    %131 = vmatpush1.msra.mxu0 0.0
    %132 = vmatprep.subr.mxu0 0.0
    %133 = vmatpush1.msra.mxu0 0.0
    %134 = vmatprep.subr.mxu0 0.0
    %135 = vmatpush1.msra.mxu0 0.0
    %136 = vmatprep.subr.mxu0 0.0
    %137 = vmatpush1.msra.mxu0 0.0
    %138 = vmatprep.subr.mxu0 0.0
    %139 = vmatpush1.msra.mxu0 0.0
    %140 = vmatprep.subr.mxu0 0.0
    %141 = vmatpush1.msra.mxu0 0.0
    %142 = vmatprep.subr.mxu0 0.0
    %143 = vmatpush1.msra.mxu0 0.0
    %144 = vmatprep.subr.mxu0 0.0
    %145 = vmatpush1.msra.mxu0 0.0
    %146 = vmatprep.subr.mxu0 0.0
    %147 = vmatpush1.msra.mxu0 0.0
    %148 = vmatprep.subr.mxu0 0.0
    %149 = vmatpush1.msra.mxu0 0.0
    %150 = vmatprep.subr.mxu0 0.0
    %151 = vmatpush1.msra.mxu0 0.0
    %152 = vmatprep.subr.mxu0 0.0
    %153 = vmatpush1.msra.mxu0 0.0
    %154 = vmatprep.mubr.f32.mxu0 0.0
    %155 = vmatmul.mubr.f32.gmra.mrb[0].mxu0 %v88
    %v156 = vpop.f32.mrb[0].mxu0
    %v157 = vadd.f32 %v84, %v156
    %v158 = vpop.f32.mrb[0].mxu0
    %159 = vdwg.mxu0
    %v160 = vmul.f32 %v157, 0.17677669
    %v162 = vsel %vm86, %v160, 0
    %v165 = vsel %vm86, %v53, 0
    %v168 = vsel %vm86, %v54, 0
    %v171 = vsel %vm86, %v55, 0
    %v174 = vsel %vm86, %v56, 0
    %176 = vmatprep.subr.mxu0 0.0
    %177 = vmatpush1.xpose.msra.mxu0 %v165
    %178 = vmatprep.subr.mxu0 0.0
    %179 = vmatpush1.xpose.msra.mxu0 %v168
    %180 = vmatprep.subr.mxu0 0.0
    %181 = vmatpush1.xpose.msra.mxu0 %v171
    %182 = vmatprep.subr.mxu0 0.0
    %183 = vmatpush1.xpose.msra.mxu0 %v174
    %184 = vmatprep.subr.mxu0 0.0
    %185 = vmatpush1.xpose.msra.mxu0 0.0
    %186 = vmatprep.subr.mxu0 0.0
    %187 = vmatpush1.xpose.msra.mxu0 0.0
    %188 = vmatprep.subr.mxu0 0.0
    %189 = vmatpush1.xpose.msra.mxu0 0.0
    %190 = vmatprep.subr.mxu0 0.0
    %191 = vmatpush1.xpose.msra.mxu0 0.0
    %192 = vmatprep.subr.mxu0 0.0
    %193 = vmatpush1.xpose.msra.mxu0 0.0
    %194 = vmatprep.subr.mxu0 0.0
    %195 = vmatpush1.xpose.msra.mxu0 0.0
    %196 = vmatprep.subr.mxu0 0.0
    %197 = vmatpush1.xpose.msra.mxu0 0.0
    %198 = vmatprep.subr.mxu0 0.0
    %199 = vmatpush1.xpose.msra.mxu0 0.0
    %200 = vmatprep.subr.mxu0 0.0
    %201 = vmatpush1.xpose.msra.mxu0 0.0
    %202 = vmatprep.subr.mxu0 0.0
    %203 = vmatpush1.xpose.msra.mxu0 0.0
    %204 = vmatprep.subr.mxu0 0.0
    %205 = vmatpush1.xpose.msra.mxu0 0.0
    %206 = vmatprep.subr.mxu0 0.0
    %207 = vmatpush1.xpose.msra.mxu0 0.0
    %208 = vmatprep.subr.mxu0 0.0
    %209 = vmatpush1.xpose.msra.mxu0 0.0
    %210 = vmatprep.subr.mxu0 0.0
    %211 = vmatpush1.xpose.msra.mxu0 0.0
    %212 = vmatprep.subr.mxu0 0.0
    %213 = vmatpush1.xpose.msra.mxu0 0.0
    %214 = vmatprep.subr.mxu0 0.0
    %215 = vmatpush1.xpose.msra.mxu0 0.0
    %216 = vmatprep.subr.mxu0 0.0
    %217 = vmatpush1.xpose.msra.mxu0 0.0
    %218 = vmatprep.subr.mxu0 0.0
    %219 = vmatpush1.xpose.msra.mxu0 0.0
    %220 = vmatprep.subr.mxu0 0.0
    %221 = vmatpush1.xpose.msra.mxu0 0.0
    %222 = vmatprep.subr.mxu0 0.0
    %223 = vmatpush1.xpose.msra.mxu0 0.0
    %224 = vmatprep.subr.mxu0 0.0
    %225 = vmatpush1.xpose.msra.mxu0 0.0
    %226 = vmatprep.subr.mxu0 0.0
    %227 = vmatpush1.xpose.msra.mxu0 0.0
    %228 = vmatprep.subr.mxu0 0.0
    %229 = vmatpush1.xpose.msra.mxu0 0.0
    %230 = vmatprep.subr.mxu0 0.0
    %231 = vmatpush1.xpose.msra.mxu0 0.0
    %232 = vmatprep.subr.mxu0 0.0
    %233 = vmatpush1.xpose.msra.mxu0 0.0
    %234 = vmatprep.subr.mxu0 0.0
    %235 = vmatpush1.xpose.msra.mxu0 0.0
    %236 = vmatprep.subr.mxu0 0.0
    %237 = vmatpush1.xpose.msra.mxu0 0.0
    %238 = vmatprep.subr.mxu0 0.0
    %239 = vmatpush1.xpose.msra.mxu0 0.0
    %240 = vmatprep.mubr.f32.mxu0 0.0
    %241 = vmatmul.mubr.f32.gmra.mrb[0].mxu0 %v162
    %v242 = vpop.f32.mrb[0].mxu0
    %v243 = vadd.f32 0.0, %v242
    %v244 = vpop.f32.mrb[0].mxu0
    %245 = vdwg.mxu0
    %v247 = vlaneseq
    %v248 = vshrl.u32 %v247, 7
    %v249 = vsub.s32 0, %v248
    %v250 = vrot.slane %v64, %v249
    %v252 = vmul.f32 %v160, %v250
    %v253 = vsel %vm86, %v252, 0.0
    %254 = vadd.xlane.f32.xlu0 %v253
    %v255 = vpop.xlane.xlu0 %254
    %v257 = vcombine.high %v243, %v243
    %v259 = vunpack.c.l.s4 1966171168
    %v260 = vunpack.c.0.s8 %v259
    %v261 = vlaneseq
    %v262 = vshrl.u32 %v261, 7
    %v263 = vsub.s32 %v260, %v262
    %v264 = vrot.slane %v243, %v263
    %v266 = vunpack.c.l.s4 1966171168
    %v267 = vunpack.c.0.s8 %v266
    %v268 = vlaneseq
    %v269 = vshrl.u32 %v268, 7
    %v270 = vsub.s32 %v267, %v269
    %v271 = vrot.slane %v257, %v270
    %v272 = vcombine.high %v264, %v264
    %v273 = vcombine.high %v271, %v271
    %v275 = vunpack.c.l.s4 1966171168
    %v276 = vunpack.c.0.s8 %v275
    %v277 = vlaneseq
    %v278 = vshrl.u32 %v277, 7
    %v279 = vsub.s32 %v276, %v278
    %v280 = vrot.slane %v264, %v279
    %v282 = vunpack.c.l.s4 1966171168
    %v283 = vunpack.c.0.s8 %v282
    %v284 = vlaneseq
    %v285 = vshrl.u32 %v284, 7
    %v286 = vsub.s32 %v283, %v285
    %v287 = vrot.slane %v271, %v286
    %v289 = vunpack.c.l.s4 1966171168
    %v290 = vunpack.c.0.s8 %v289
    %v291 = vlaneseq
    %v292 = vshrl.u32 %v291, 7
    %v293 = vsub.s32 %v290, %v292
    %v294 = vrot.slane %v272, %v293
    %v296 = vunpack.c.l.s4 1966171168
    %v297 = vunpack.c.0.s8 %v296
    %v298 = vlaneseq
    %v299 = vshrl.u32 %v298, 7
    %v300 = vsub.s32 %v297, %v299
    %v301 = vrot.slane %v273, %v300
    %v302 = vcombine.high %v280, %v280
    %v303 = vcombine.high %v287, %v287
    %v304 = vcombine.high %v294, %v294
    %v305 = vcombine.high %v301, %v301
    %v306 = vlaneseq
    %v307 = vshrl.u32 %v306, 7
    %v308 = vsub.s32 0, %v307
    %v309 = vrot.slane %v280, %v308
    %v310 = vlaneseq
    %v311 = vshrl.u32 %v310, 7
    %v312 = vsub.s32 0, %v311
    %v313 = vrot.slane %v294, %v312
    %v314 = vlaneseq
    %v315 = vshrl.u32 %v314, 7
    %v316 = vsub.s32 0, %v315
    %v317 = vrot.slane %v302, %v316
    %v318 = vlaneseq
    %v319 = vshrl.u32 %v318, 7
    %v320 = vsub.s32 0, %v319
    %v321 = vrot.slane %v304, %v320
    %v322 = vlaneseq
    %v323 = vshrl.u32 %v322, 7
    %v324 = vsub.s32 0, %v323
    %v325 = vrot.slane %v287, %v324
    %v326 = vlaneseq
    %v327 = vshrl.u32 %v326, 7
    %v328 = vsub.s32 0, %v327
    %v329 = vrot.slane %v301, %v328
    %v330 = vlaneseq
    %v331 = vshrl.u32 %v330, 7
    %v332 = vsub.s32 0, %v331
    %v333 = vrot.slane %v303, %v332
    %v334 = vlaneseq
    %v335 = vshrl.u32 %v334, 7
    %v336 = vsub.s32 0, %v335
    %v337 = vrot.slane %v305, %v336
    %v346 = vmul.f32 %v30, %v309
    %v347 = vmul.f32 %v31, %v309
    %v348 = vmul.f32 %v32, %v313
    %v349 = vmul.f32 %v33, %v313
    %v350 = vmul.f32 %v34, %v317
    %v351 = vmul.f32 %v35, %v317
    %v352 = vmul.f32 %v36, %v321
    %v353 = vmul.f32 %v37, %v321
    %v354 = vmul.f32 %v38, %v325
    %v355 = vmul.f32 %v39, %v325
    %v356 = vmul.f32 %v40, %v329
    %v357 = vmul.f32 %v41, %v329
    %v358 = vmul.f32 %v42, %v333
    %v359 = vmul.f32 %v43, %v333
    %v360 = vmul.f32 %v44, %v337
    %v361 = vmul.f32 %v45, %v337
    %v362 = vsel %vm86, %v346, 0.0
    %363 = vadd.xlane.f32.xlu0 %v362
    %v364 = vpop.xlane.xlu0 %363
    %vm365 = vcmask 253952
    %v366 = vsel %vm365, %v347, 0.0
    %367 = vadd.xlane.f32.xlu0 %v366
    %v368 = vpop.xlane.xlu0 %367
    %v369 = vsel %vm86, %v348, 0.0
    %370 = vadd.xlane.f32.xlu0 %v369
    %v371 = vpop.xlane.xlu0 %370
    %v372 = vsel %vm365, %v349, 0.0
    %373 = vadd.xlane.f32.xlu0 %v372
    %v374 = vpop.xlane.xlu0 %373
    %v375 = vsel %vm86, %v350, 0.0
    %376 = vadd.xlane.f32.xlu0 %v375
    %v377 = vpop.xlane.xlu0 %376
    %v378 = vsel %vm365, %v351, 0.0
    %379 = vadd.xlane.f32.xlu0 %v378
    %v380 = vpop.xlane.xlu0 %379
    %v381 = vsel %vm86, %v352, 0.0
    %382 = vadd.xlane.f32.xlu0 %v381
    %v383 = vpop.xlane.xlu0 %382
    %v384 = vsel %vm365, %v353, 0.0
    %385 = vadd.xlane.f32.xlu0 %v384
    %v386 = vpop.xlane.xlu0 %385
    %v387 = vsel %vm86, %v354, 0.0
    %388 = vadd.xlane.f32.xlu0 %v387
    %v389 = vpop.xlane.xlu0 %388
    %v390 = vsel %vm365, %v355, 0.0
    %391 = vadd.xlane.f32.xlu0 %v390
    %v392 = vpop.xlane.xlu0 %391
    %v393 = vsel %vm86, %v356, 0.0
    %394 = vadd.xlane.f32.xlu0 %v393
    %v395 = vpop.xlane.xlu0 %394
    %v396 = vsel %vm365, %v357, 0.0
    %397 = vadd.xlane.f32.xlu0 %v396
    %v398 = vpop.xlane.xlu0 %397
    %v399 = vsel %vm86, %v358, 0.0
    %400 = vadd.xlane.f32.xlu0 %v399
    %v401 = vpop.xlane.xlu0 %400
    %v402 = vsel %vm365, %v359, 0.0
    %403 = vadd.xlane.f32.xlu0 %v402
    %v404 = vpop.xlane.xlu0 %403
    %v405 = vsel %vm86, %v360, 0.0
    %406 = vadd.xlane.f32.xlu0 %v405
    %v407 = vpop.xlane.xlu0 %406
    %v408 = vsel %vm365, %v361, 0.0
    %409 = vadd.xlane.f32.xlu0 %v408
    %v410 = vpop.xlane.xlu0 %409
    %v412 = vlaneseq
    %v413 = vshrl.u32 %v412, 7
    %v414 = vsub.s32 0, %v413
    %v415 = vrot.slane %v255, %v414
    %v416 = vlaneseq
    %v417 = vshrl.u32 %v416, 7
    %v418 = vsub.s32 1, %v417
    %v419 = vrot.slane %v255, %v418
    %v420 = vlaneseq
    %v421 = vshrl.u32 %v420, 7
    %v422 = vsub.s32 2, %v421
    %v423 = vrot.slane %v255, %v422
    %v424 = vlaneseq
    %v425 = vshrl.u32 %v424, 7
    %v426 = vsub.s32 3, %v425
    %v427 = vrot.slane %v255, %v426
    %v428 = vlaneseq
    %v429 = vshrl.u32 %v428, 7
    %v430 = vsub.s32 4, %v429
    %v431 = vrot.slane %v255, %v430
    %v432 = vlaneseq
    %v433 = vshrl.u32 %v432, 7
    %v434 = vsub.s32 5, %v433
    %v435 = vrot.slane %v255, %v434
    %v436 = vlaneseq
    %v437 = vshrl.u32 %v436, 7
    %v438 = vsub.s32 6, %v437
    %v439 = vrot.slane %v255, %v438
    %v440 = vlaneseq
    %v441 = vshrl.u32 %v440, 7
    %v442 = vsub.s32 7, %v441
    %v443 = vrot.slane %v255, %v442
    %v452 = vadd.f32 %v364, %v415
    %v453 = vadd.f32 %v368, %v415
    %v454 = vadd.f32 %v371, %v419
    %v455 = vadd.f32 %v374, %v419
    %v456 = vadd.f32 %v377, %v423
    %v457 = vadd.f32 %v380, %v423
    %v458 = vadd.f32 %v383, %v427
    %v459 = vadd.f32 %v386, %v427
    %v460 = vadd.f32 %v389, %v431
    %v461 = vadd.f32 %v392, %v431
    %v462 = vadd.f32 %v395, %v435
    %v463 = vadd.f32 %v398, %v435
    %v464 = vadd.f32 %v401, %v439
    %v465 = vadd.f32 %v404, %v439
    %v466 = vadd.f32 %v407, %v443
    %v467 = vadd.f32 %v410, %v443
    %v469 = vsel %vm86, %v67, 0
    %v472 = vsel %vm86, %v68, 0
    %v475 = vsel %vm86, %v69, 0
    %v478 = vsel %vm86, %v70, 0
    %480 = vmatprep.subr.mxu0 0.0
    %481 = vmatpush1.xpose.msra.mxu0 %v469
    %482 = vmatprep.subr.mxu0 0.0
    %483 = vmatpush1.xpose.msra.mxu0 %v472
    %484 = vmatprep.subr.mxu0 0.0
    %485 = vmatpush1.xpose.msra.mxu0 %v475
    %486 = vmatprep.subr.mxu0 0.0
    %487 = vmatpush1.xpose.msra.mxu0 %v478
    %488 = vmatprep.subr.mxu0 0.0
    %489 = vmatpush1.xpose.msra.mxu0 0.0
    %490 = vmatprep.subr.mxu0 0.0
    %491 = vmatpush1.xpose.msra.mxu0 0.0
    %492 = vmatprep.subr.mxu0 0.0
    %493 = vmatpush1.xpose.msra.mxu0 0.0
    %494 = vmatprep.subr.mxu0 0.0
    %495 = vmatpush1.xpose.msra.mxu0 0.0
    %496 = vmatprep.subr.mxu0 0.0
    %497 = vmatpush1.xpose.msra.mxu0 0.0
    %498 = vmatprep.subr.mxu0 0.0
    %499 = vmatpush1.xpose.msra.mxu0 0.0
    %500 = vmatprep.subr.mxu0 0.0
    %501 = vmatpush1.xpose.msra.mxu0 0.0
    %502 = vmatprep.subr.mxu0 0.0
    %503 = vmatpush1.xpose.msra.mxu0 0.0
    %504 = vmatprep.subr.mxu0 0.0
    %505 = vmatpush1.xpose.msra.mxu0 0.0
    %506 = vmatprep.subr.mxu0 0.0
    %507 = vmatpush1.xpose.msra.mxu0 0.0
    %508 = vmatprep.subr.mxu0 0.0
    %509 = vmatpush1.xpose.msra.mxu0 0.0
    %510 = vmatprep.subr.mxu0 0.0
    %511 = vmatpush1.xpose.msra.mxu0 0.0
    %512 = vmatprep.subr.mxu0 0.0
    %513 = vmatpush1.xpose.msra.mxu0 0.0
    %514 = vmatprep.subr.mxu0 0.0
    %515 = vmatpush1.xpose.msra.mxu0 0.0
    %516 = vmatprep.subr.mxu0 0.0
    %517 = vmatpush1.xpose.msra.mxu0 0.0
    %518 = vmatprep.subr.mxu0 0.0
    %519 = vmatpush1.xpose.msra.mxu0 0.0
    %520 = vmatprep.subr.mxu0 0.0
    %521 = vmatpush1.xpose.msra.mxu0 0.0
    %522 = vmatprep.subr.mxu0 0.0
    %523 = vmatpush1.xpose.msra.mxu0 0.0
    %524 = vmatprep.subr.mxu0 0.0
    %525 = vmatpush1.xpose.msra.mxu0 0.0
    %526 = vmatprep.subr.mxu0 0.0
    %527 = vmatpush1.xpose.msra.mxu0 0.0
    %528 = vmatprep.subr.mxu0 0.0
    %529 = vmatpush1.xpose.msra.mxu0 0.0
    %530 = vmatprep.subr.mxu0 0.0
    %531 = vmatpush1.xpose.msra.mxu0 0.0
    %532 = vmatprep.subr.mxu0 0.0
    %533 = vmatpush1.xpose.msra.mxu0 0.0
    %534 = vmatprep.subr.mxu0 0.0
    %535 = vmatpush1.xpose.msra.mxu0 0.0
    %536 = vmatprep.subr.mxu0 0.0
    %537 = vmatpush1.xpose.msra.mxu0 0.0
    %538 = vmatprep.subr.mxu0 0.0
    %539 = vmatpush1.xpose.msra.mxu0 0.0
    %540 = vmatprep.subr.mxu0 0.0
    %541 = vmatpush1.xpose.msra.mxu0 0.0
    %542 = vmatprep.subr.mxu0 0.0
    %543 = vmatpush1.xpose.msra.mxu0 0.0
    %544 = vmatprep.mubr.f32.mxu0 0.0
    %545 = vmatmul.mubr.f32.gmra.mrb[0].mxu0 %v162
    %v546 = vpop.f32.mrb[0].mxu0
    %v547 = vadd.f32 0.0, %v546
    %v548 = vpop.f32.mrb[0].mxu0
    %549 = vdwg.mxu0
    %v550 = vmul.f32 %v46, %v547
    %v551 = vsel %vm86, %v550, 0.0
    %552 = vadd.xlane.f32.xlu0 %v551
    %v553 = vpop.xlane.xlu0 %552
    %v555 = vsel %vm86, %v547, 0
    %v558 = vsel %vm86, %v47, 0
    %560 = vmatprep.subr.mxu0 0.0
    %561 = vmatpush1.xpose.msra.mxu0 %v558
    %562 = vmatprep.subr.mxu0 0.0
    %563 = vmatpush1.xpose.msra.mxu0 0.0
    %564 = vmatprep.subr.mxu0 0.0
    %565 = vmatpush1.xpose.msra.mxu0 0.0
    %566 = vmatprep.subr.mxu0 0.0
    %567 = vmatpush1.xpose.msra.mxu0 0.0
    %568 = vmatprep.subr.mxu0 0.0
    %569 = vmatpush1.xpose.msra.mxu0 0.0
    %570 = vmatprep.subr.mxu0 0.0
    %571 = vmatpush1.xpose.msra.mxu0 0.0
    %572 = vmatprep.subr.mxu0 0.0
    %573 = vmatpush1.xpose.msra.mxu0 0.0
    %574 = vmatprep.subr.mxu0 0.0
    %575 = vmatpush1.xpose.msra.mxu0 0.0
    %576 = vmatprep.subr.mxu0 0.0
    %577 = vmatpush1.xpose.msra.mxu0 0.0
    %578 = vmatprep.subr.mxu0 0.0
    %579 = vmatpush1.xpose.msra.mxu0 0.0
    %580 = vmatprep.subr.mxu0 0.0
    %581 = vmatpush1.xpose.msra.mxu0 0.0
    %582 = vmatprep.subr.mxu0 0.0
    %583 = vmatpush1.xpose.msra.mxu0 0.0
    %584 = vmatprep.subr.mxu0 0.0
    %585 = vmatpush1.xpose.msra.mxu0 0.0
    %586 = vmatprep.subr.mxu0 0.0
    %587 = vmatpush1.xpose.msra.mxu0 0.0
    %588 = vmatprep.subr.mxu0 0.0
    %589 = vmatpush1.xpose.msra.mxu0 0.0
    %590 = vmatprep.subr.mxu0 0.0
    %591 = vmatpush1.xpose.msra.mxu0 0.0
    %592 = vmatprep.subr.mxu0 0.0
    %593 = vmatpush1.xpose.msra.mxu0 0.0
    %594 = vmatprep.subr.mxu0 0.0
    %595 = vmatpush1.xpose.msra.mxu0 0.0
    %596 = vmatprep.subr.mxu0 0.0
    %597 = vmatpush1.xpose.msra.mxu0 0.0
    %598 = vmatprep.subr.mxu0 0.0
    %599 = vmatpush1.xpose.msra.mxu0 0.0
    %600 = vmatprep.subr.mxu0 0.0
    %601 = vmatpush1.xpose.msra.mxu0 0.0
    %602 = vmatprep.subr.mxu0 0.0
    %603 = vmatpush1.xpose.msra.mxu0 0.0
    %604 = vmatprep.subr.mxu0 0.0
    %605 = vmatpush1.xpose.msra.mxu0 0.0
    %606 = vmatprep.subr.mxu0 0.0
    %607 = vmatpush1.xpose.msra.mxu0 0.0
    %608 = vmatprep.subr.mxu0 0.0
    %609 = vmatpush1.xpose.msra.mxu0 0.0
    %610 = vmatprep.subr.mxu0 0.0
    %611 = vmatpush1.xpose.msra.mxu0 0.0
    %612 = vmatprep.subr.mxu0 0.0
    %613 = vmatpush1.xpose.msra.mxu0 0.0
    %614 = vmatprep.subr.mxu0 0.0
    %615 = vmatpush1.xpose.msra.mxu0 0.0
    %616 = vmatprep.subr.mxu0 0.0
    %617 = vmatpush1.xpose.msra.mxu0 0.0
    %618 = vmatprep.subr.mxu0 0.0
    %619 = vmatpush1.xpose.msra.mxu0 0.0
    %620 = vmatprep.subr.mxu0 0.0
    %621 = vmatpush1.xpose.msra.mxu0 0.0
    %622 = vmatprep.subr.mxu0 0.0
    %623 = vmatpush1.xpose.msra.mxu0 0.0
    %624 = vmatprep.mubr.f32.mxu0 0.0
    %625 = vmatmul.mubr.f32.gmra.mrb[0].mxu0 %v555
    %v626 = vpop.f32.mrb[0].mxu0
    %v627 = vadd.f32 0.0, %v626
    %v628 = vpop.f32.mrb[0].mxu0
    %629 = vdwg.mxu0
    %v630 = vadd.f32 %v553, %v627
    %v632 = vlaneseq
    %v633 = vshrl.u32 %v632, 7
    %v634 = vsub.s32 0, %v633
    %v635 = vrot.slane %v76, %v634
    %v637 = vmul.f32 %v160, %v635
    %v638 = vsel %vm86, %v637, 0.0
    %639 = vadd.xlane.f32.xlu0 %v638
    %v640 = vpop.xlane.xlu0 %639
    %v641 = vadd.f32 %v630, %v640
    %658 = vset.pattern.permute.xlu0 0
    %659 = vperm.xlu0 %658, %v452
    %v660 = vpop.permute.xlu0 %659
    %661 = vset.pattern.permute.xlu0 0
    %662 = vperm.xlu0 %661, %v453
    %v663 = vpop.permute.xlu0 %662
    %664 = vset.pattern.permute.xlu0 0
    %665 = vperm.xlu0 %664, %v454
    %v666 = vpop.permute.xlu0 %665
    %667 = vset.pattern.permute.xlu0 0
    %668 = vperm.xlu0 %667, %v455
    %v669 = vpop.permute.xlu0 %668
    %670 = vset.pattern.permute.xlu0 0
    %671 = vperm.xlu0 %670, %v456
    %v672 = vpop.permute.xlu0 %671
    %673 = vset.pattern.permute.xlu0 0
    %674 = vperm.xlu0 %673, %v457
    %v675 = vpop.permute.xlu0 %674
    %676 = vset.pattern.permute.xlu0 0
    %677 = vperm.xlu0 %676, %v458
    %v678 = vpop.permute.xlu0 %677
    %679 = vset.pattern.permute.xlu0 0
    %680 = vperm.xlu0 %679, %v459
    %v681 = vpop.permute.xlu0 %680
    %682 = vset.pattern.permute.xlu0 0
    %683 = vperm.xlu0 %682, %v460
    %v684 = vpop.permute.xlu0 %683
    %685 = vset.pattern.permute.xlu0 0
    %686 = vperm.xlu0 %685, %v461
    %v687 = vpop.permute.xlu0 %686
    %688 = vset.pattern.permute.xlu0 0
    %689 = vperm.xlu0 %688, %v462
    %v690 = vpop.permute.xlu0 %689
    %691 = vset.pattern.permute.xlu0 0
    %692 = vperm.xlu0 %691, %v463
    %v693 = vpop.permute.xlu0 %692
    %694 = vset.pattern.permute.xlu0 0
    %695 = vperm.xlu0 %694, %v464
    %v696 = vpop.permute.xlu0 %695
    %697 = vset.pattern.permute.xlu0 0
    %698 = vperm.xlu0 %697, %v465
    %v699 = vpop.permute.xlu0 %698
    %700 = vset.pattern.permute.xlu0 0
    %701 = vperm.xlu0 %700, %v466
    %v702 = vpop.permute.xlu0 %701
    %703 = vset.pattern.permute.xlu0 0
    %704 = vperm.xlu0 %703, %v467
    %v705 = vpop.permute.xlu0 %704
    %v706 = vlaneseq
    %v707 = vand.u32 %v706, 127
    %v708 = vlaneseq
    %v709 = vshrl.u32 %v708, 7
    %v710 = vsub.s32 %v707, %v709
    %v711 = vrot.slane %v660, %v710
    %v712 = vadd.s32 %v707, 4294967288
    %v713 = vlaneseq
    %v714 = vshrl.u32 %v713, 7
    %v715 = vsub.s32 %v712, %v714
    %v716 = vrot.slane %v663, %v715
    %vm717 = vcmask 130112
    %v718 = vsel %vm717, %v716, %v711
    %v719 = vlaneseq
    %v720 = vshrl.u32 %v719, 7
    %v721 = vsub.s32 %v707, %v720
    %v722 = vrot.slane %v666, %v721
    %v723 = vlaneseq
    %v724 = vshrl.u32 %v723, 7
    %v725 = vsub.s32 %v712, %v724
    %v726 = vrot.slane %v669, %v725
    %v727 = vsel %vm717, %v726, %v722
    %v728 = vlaneseq
    %v729 = vshrl.u32 %v728, 7
    %v730 = vsub.s32 %v707, %v729
    %v731 = vrot.slane %v672, %v730
    %v732 = vlaneseq
    %v733 = vshrl.u32 %v732, 7
    %v734 = vsub.s32 %v712, %v733
    %v735 = vrot.slane %v675, %v734
    %v736 = vsel %vm717, %v735, %v731
    %v737 = vlaneseq
    %v738 = vshrl.u32 %v737, 7
    %v739 = vsub.s32 %v707, %v738
    %v740 = vrot.slane %v678, %v739
    %v741 = vlaneseq
    %v742 = vshrl.u32 %v741, 7
    %v743 = vsub.s32 %v712, %v742
    %v744 = vrot.slane %v681, %v743
    %v745 = vsel %vm717, %v744, %v740
    %v746 = vlaneseq
    %v747 = vshrl.u32 %v746, 7
    %v748 = vsub.s32 %v707, %v747
    %v749 = vrot.slane %v684, %v748
    %v750 = vlaneseq
    %v751 = vshrl.u32 %v750, 7
    %v752 = vsub.s32 %v712, %v751
    %v753 = vrot.slane %v687, %v752
    %v754 = vsel %vm717, %v753, %v749
    %v755 = vlaneseq
    %v756 = vshrl.u32 %v755, 7
    %v757 = vsub.s32 %v707, %v756
    %v758 = vrot.slane %v690, %v757
    %v759 = vlaneseq
    %v760 = vshrl.u32 %v759, 7
    %v761 = vsub.s32 %v712, %v760
    %v762 = vrot.slane %v693, %v761
    %v763 = vsel %vm717, %v762, %v758
    %v764 = vlaneseq
    %v765 = vshrl.u32 %v764, 7
    %v766 = vsub.s32 %v707, %v765
    %v767 = vrot.slane %v696, %v766
    %v768 = vlaneseq
    %v769 = vshrl.u32 %v768, 7
    %v770 = vsub.s32 %v712, %v769
    %v771 = vrot.slane %v699, %v770
    %v772 = vsel %vm717, %v771, %v767
    %v773 = vlaneseq
    %v774 = vshrl.u32 %v773, 7
    %v775 = vsub.s32 %v707, %v774
    %v776 = vrot.slane %v702, %v775
    %v777 = vlaneseq
    %v778 = vshrl.u32 %v777, 7
    %v779 = vsub.s32 %v712, %v778
    %v780 = vrot.slane %v705, %v779
    %v781 = vsel %vm717, %v780, %v776
    %vm782 = vcmask 1041409
    %v783 = vsel %vm782, %v727, %v718
    %vm784 = vcmask 1042434
    %v785 = vsel %vm784, %v736, %v783
    %vm786 = vcmask 1043459
    %v787 = vsel %vm786, %v745, %v785
    %vm788 = vcmask 1044484
    %v789 = vsel %vm788, %v754, %v787
    %vm790 = vcmask 1045509
    %v791 = vsel %vm790, %v763, %v789
    %vm792 = vcmask 1046534
    %v793 = vsel %vm792, %v772, %v791
    %vm794 = vcmask 1047559
    %v795 = vsel %vm794, %v781, %v793
    %vm797 = vcmask 72704
    %v798 = vsel %vm797, %v795, -inf
    %799 = vmax.xlane.f32.xlu0 %v798
    %v800 = vpop.xlane.xlu0 %799
    %vm801 = vcmask 64512
    %v802 = vsel %vm801, %v641, -inf
    %803 = vmax.xlane.f32.xlu0 %v802
    %v804 = vpop.xlane.xlu0 %803
    %v805 = vmax.f32 %v800, %v804
    %v807 = vlaneseq
    %v808 = vshrl.u32 %v807, 7
    %v809 = vsub.s32 0, %v808
    %v810 = vrot.slane %v805, %v809
    %v811 = vlaneseq
    %v812 = vshrl.u32 %v811, 7
    %v813 = vsub.s32 1, %v812
    %v814 = vrot.slane %v805, %v813
    %v815 = vlaneseq
    %v816 = vshrl.u32 %v815, 7
    %v817 = vsub.s32 2, %v816
    %v818 = vrot.slane %v805, %v817
    %v819 = vlaneseq
    %v820 = vshrl.u32 %v819, 7
    %v821 = vsub.s32 3, %v820
    %v822 = vrot.slane %v805, %v821
    %v823 = vlaneseq
    %v824 = vshrl.u32 %v823, 7
    %v825 = vsub.s32 4, %v824
    %v826 = vrot.slane %v805, %v825
    %v827 = vlaneseq
    %v828 = vshrl.u32 %v827, 7
    %v829 = vsub.s32 5, %v828
    %v830 = vrot.slane %v805, %v829
    %v831 = vlaneseq
    %v832 = vshrl.u32 %v831, 7
    %v833 = vsub.s32 6, %v832
    %v834 = vrot.slane %v805, %v833
    %v835 = vlaneseq
    %v836 = vshrl.u32 %v835, 7
    %v837 = vsub.s32 7, %v836
    %v838 = vrot.slane %v805, %v837
    %v847 = vsub.f32 %v452, %v810
    %v848 = vsub.f32 %v453, %v810
    %v849 = vsub.f32 %v454, %v814
    %v850 = vsub.f32 %v455, %v814
    %v851 = vsub.f32 %v456, %v818
    %v852 = vsub.f32 %v457, %v818
    %v853 = vsub.f32 %v458, %v822
    %v854 = vsub.f32 %v459, %v822
    %v855 = vsub.f32 %v460, %v826
    %v856 = vsub.f32 %v461, %v826
    %v857 = vsub.f32 %v462, %v830
    %v858 = vsub.f32 %v463, %v830
    %v859 = vsub.f32 %v464, %v834
    %v860 = vsub.f32 %v465, %v834
    %v861 = vsub.f32 %v466, %v838
    %v862 = vsub.f32 %v467, %v838
    %v863 = vmul.f32 %v847, 1.442695
    %v864 = vpow.pop %v863
    %v865 = vmul.f32 %v848, 1.442695
    %v866 = vpow.pop %v865
    %v867 = vmul.f32 %v849, 1.442695
    %v868 = vpow.pop %v867
    %v869 = vmul.f32 %v850, 1.442695
    %v870 = vpow.pop %v869
    %v871 = vmul.f32 %v851, 1.442695
    %v872 = vpow.pop %v871
    %v873 = vmul.f32 %v852, 1.442695
    %v874 = vpow.pop %v873
    %v875 = vmul.f32 %v853, 1.442695
    %v876 = vpow.pop %v875
    %v877 = vmul.f32 %v854, 1.442695
    %v878 = vpow.pop %v877
    %v879 = vmul.f32 %v855, 1.442695
    %v880 = vpow.pop %v879
    %v881 = vmul.f32 %v856, 1.442695
    %v882 = vpow.pop %v881
    %v883 = vmul.f32 %v857, 1.442695
    %v884 = vpow.pop %v883
    %v885 = vmul.f32 %v858, 1.442695
    %v886 = vpow.pop %v885
    %v887 = vmul.f32 %v859, 1.442695
    %v888 = vpow.pop %v887
    %v889 = vmul.f32 %v860, 1.442695
    %v890 = vpow.pop %v889
    %v891 = vmul.f32 %v861, 1.442695
    %v892 = vpow.pop %v891
    %v893 = vmul.f32 %v862, 1.442695
    %v894 = vpow.pop %v893
    %v895 = vsub.f32 %v641, %v805
    %v896 = vmul.f32 %v895, 1.442695
    %v897 = vpow.pop %v896
    %914 = vset.pattern.permute.xlu0 0
    %915 = vperm.xlu0 %914, %v864
    %v916 = vpop.permute.xlu0 %915
    %917 = vset.pattern.permute.xlu0 0
    %918 = vperm.xlu0 %917, %v866
    %v919 = vpop.permute.xlu0 %918
    %920 = vset.pattern.permute.xlu0 0
    %921 = vperm.xlu0 %920, %v868
    %v922 = vpop.permute.xlu0 %921
    %923 = vset.pattern.permute.xlu0 0
    %924 = vperm.xlu0 %923, %v870
    %v925 = vpop.permute.xlu0 %924
    %926 = vset.pattern.permute.xlu0 0
    %927 = vperm.xlu0 %926, %v872
    %v928 = vpop.permute.xlu0 %927
    %929 = vset.pattern.permute.xlu0 0
    %930 = vperm.xlu0 %929, %v874
    %v931 = vpop.permute.xlu0 %930
    %932 = vset.pattern.permute.xlu0 0
    %933 = vperm.xlu0 %932, %v876
    %v934 = vpop.permute.xlu0 %933
    %935 = vset.pattern.permute.xlu0 0
    %936 = vperm.xlu0 %935, %v878
    %v937 = vpop.permute.xlu0 %936
    %938 = vset.pattern.permute.xlu0 0
    %939 = vperm.xlu0 %938, %v880
    %v940 = vpop.permute.xlu0 %939
    %941 = vset.pattern.permute.xlu0 0
    %942 = vperm.xlu0 %941, %v882
    %v943 = vpop.permute.xlu0 %942
    %944 = vset.pattern.permute.xlu0 0
    %945 = vperm.xlu0 %944, %v884
    %v946 = vpop.permute.xlu0 %945
    %947 = vset.pattern.permute.xlu0 0
    %948 = vperm.xlu0 %947, %v886
    %v949 = vpop.permute.xlu0 %948
    %950 = vset.pattern.permute.xlu0 0
    %951 = vperm.xlu0 %950, %v888
    %v952 = vpop.permute.xlu0 %951
    %953 = vset.pattern.permute.xlu0 0
    %954 = vperm.xlu0 %953, %v890
    %v955 = vpop.permute.xlu0 %954
    %956 = vset.pattern.permute.xlu0 0
    %957 = vperm.xlu0 %956, %v892
    %v958 = vpop.permute.xlu0 %957
    %959 = vset.pattern.permute.xlu0 0
    %960 = vperm.xlu0 %959, %v894
    %v961 = vpop.permute.xlu0 %960
    %v962 = vlaneseq
    %v963 = vshrl.u32 %v962, 7
    %v964 = vsub.s32 %v707, %v963
    %v965 = vrot.slane %v916, %v964
    %v966 = vlaneseq
    %v967 = vshrl.u32 %v966, 7
    %v968 = vsub.s32 %v712, %v967
    %v969 = vrot.slane %v919, %v968
    %v970 = vsel %vm717, %v969, %v965
    %v971 = vlaneseq
    %v972 = vshrl.u32 %v971, 7
    %v973 = vsub.s32 %v707, %v972
    %v974 = vrot.slane %v922, %v973
    %v975 = vlaneseq
    %v976 = vshrl.u32 %v975, 7
    %v977 = vsub.s32 %v712, %v976
    %v978 = vrot.slane %v925, %v977
    %v979 = vsel %vm717, %v978, %v974
    %v980 = vlaneseq
    %v981 = vshrl.u32 %v980, 7
    %v982 = vsub.s32 %v707, %v981
    %v983 = vrot.slane %v928, %v982
    %v984 = vlaneseq
    %v985 = vshrl.u32 %v984, 7
    %v986 = vsub.s32 %v712, %v985
    %v987 = vrot.slane %v931, %v986
    %v988 = vsel %vm717, %v987, %v983
    %v989 = vlaneseq
    %v990 = vshrl.u32 %v989, 7
    %v991 = vsub.s32 %v707, %v990
    %v992 = vrot.slane %v934, %v991
    %v993 = vlaneseq
    %v994 = vshrl.u32 %v993, 7
    %v995 = vsub.s32 %v712, %v994
    %v996 = vrot.slane %v937, %v995
    %v997 = vsel %vm717, %v996, %v992
    %v998 = vlaneseq
    %v999 = vshrl.u32 %v998, 7
    %v1000 = vsub.s32 %v707, %v999
    %v1001 = vrot.slane %v940, %v1000
    %v1002 = vlaneseq
    %v1003 = vshrl.u32 %v1002, 7
    %v1004 = vsub.s32 %v712, %v1003
    %v1005 = vrot.slane %v943, %v1004
    %v1006 = vsel %vm717, %v1005, %v1001
    %v1007 = vlaneseq
    %v1008 = vshrl.u32 %v1007, 7
    %v1009 = vsub.s32 %v707, %v1008
    %v1010 = vrot.slane %v946, %v1009
    %v1011 = vlaneseq
    %v1012 = vshrl.u32 %v1011, 7
    %v1013 = vsub.s32 %v712, %v1012
    %v1014 = vrot.slane %v949, %v1013
    %v1015 = vsel %vm717, %v1014, %v1010
    %v1016 = vlaneseq
    %v1017 = vshrl.u32 %v1016, 7
    %v1018 = vsub.s32 %v707, %v1017
    %v1019 = vrot.slane %v952, %v1018
    %v1020 = vlaneseq
    %v1021 = vshrl.u32 %v1020, 7
    %v1022 = vsub.s32 %v712, %v1021
    %v1023 = vrot.slane %v955, %v1022
    %v1024 = vsel %vm717, %v1023, %v1019
    %v1025 = vlaneseq
    %v1026 = vshrl.u32 %v1025, 7
    %v1027 = vsub.s32 %v707, %v1026
    %v1028 = vrot.slane %v958, %v1027
    %v1029 = vlaneseq
    %v1030 = vshrl.u32 %v1029, 7
    %v1031 = vsub.s32 %v712, %v1030
    %v1032 = vrot.slane %v961, %v1031
    %v1033 = vsel %vm717, %v1032, %v1028
    %v1034 = vsel %vm782, %v979, %v970
    %v1035 = vsel %vm784, %v988, %v1034
    %v1036 = vsel %vm786, %v997, %v1035
    %v1037 = vsel %vm788, %v1006, %v1036
    %v1038 = vsel %vm790, %v1015, %v1037
    %v1039 = vsel %vm792, %v1024, %v1038
    %v1040 = vsel %vm794, %v1033, %v1039
    %v1042 = vsel %vm797, %v1040, 0.0
    %1043 = vadd.xlane.f32.xlu0 %v1042
    %v1044 = vpop.xlane.xlu0 %1043
    %v1045 = vsel %vm801, %v897, 0.0
    %1046 = vadd.xlane.f32.xlu0 %v1045
    %v1047 = vpop.xlane.xlu0 %1046
    %v1048 = vadd.f32 %v1044, %v1047
    %v1049 = vrcp.pop %v1048
    %v1066 = vmul.f32 %v30, %v916
    %v1067 = vmul.f32 %v31, %v919
    %v1068 = vmul.f32 %v32, %v922
    %v1069 = vmul.f32 %v33, %v925
    %v1070 = vmul.f32 %v34, %v928
    %v1071 = vmul.f32 %v35, %v931
    %v1072 = vmul.f32 %v36, %v934
    %v1073 = vmul.f32 %v37, %v937
    %v1074 = vmul.f32 %v38, %v940
    %v1075 = vmul.f32 %v39, %v943
    %v1076 = vmul.f32 %v40, %v946
    %v1077 = vmul.f32 %v41, %v949
    %v1078 = vmul.f32 %v42, %v952
    %v1079 = vmul.f32 %v43, %v955
    %v1080 = vmul.f32 %v44, %v958
    %v1081 = vmul.f32 %v45, %v961
    %v1082 = vsel %vm86, %v1066, 0.0
    %v1083 = vsel %vm365, %v1067, 0.0
    %v1084 = vadd.f32 %v1082, %v1083
    %v1085 = vrot.slane %v1084, 4
    %v1086 = vadd.f32 %v1084, %v1085
    %v1087 = vrot.slane %v1086, 2
    %v1088 = vadd.f32 %v1086, %v1087
    %v1089 = vrot.slane %v1088, 1
    %v1090 = vadd.f32 %v1088, %v1089
    %v1091 = vsel %vm86, %v1068, 0.0
    %v1092 = vsel %vm365, %v1069, 0.0
    %v1093 = vadd.f32 %v1091, %v1092
    %v1094 = vrot.slane %v1093, 4
    %v1095 = vadd.f32 %v1093, %v1094
    %v1096 = vrot.slane %v1095, 2
    %v1097 = vadd.f32 %v1095, %v1096
    %v1098 = vrot.slane %v1097, 1
    %v1099 = vadd.f32 %v1097, %v1098
    %v1100 = vsel %vm86, %v1070, 0.0
    %v1101 = vsel %vm365, %v1071, 0.0
    %v1102 = vadd.f32 %v1100, %v1101
    %v1103 = vrot.slane %v1102, 4
    %v1104 = vadd.f32 %v1102, %v1103
    %v1105 = vrot.slane %v1104, 2
    %v1106 = vadd.f32 %v1104, %v1105
    %v1107 = vrot.slane %v1106, 1
    %v1108 = vadd.f32 %v1106, %v1107
    %v1109 = vsel %vm86, %v1072, 0.0
    %v1110 = vsel %vm365, %v1073, 0.0
    %v1111 = vadd.f32 %v1109, %v1110
    %v1112 = vrot.slane %v1111, 4
    %v1113 = vadd.f32 %v1111, %v1112
    %v1114 = vrot.slane %v1113, 2
    %v1115 = vadd.f32 %v1113, %v1114
    %v1116 = vrot.slane %v1115, 1
    %v1117 = vadd.f32 %v1115, %v1116
    %v1118 = vsel %vm86, %v1074, 0.0
    %v1119 = vsel %vm365, %v1075, 0.0
    %v1120 = vadd.f32 %v1118, %v1119
    %v1121 = vrot.slane %v1120, 4
    %v1122 = vadd.f32 %v1120, %v1121
    %v1123 = vrot.slane %v1122, 2
    %v1124 = vadd.f32 %v1122, %v1123
    %v1125 = vrot.slane %v1124, 1
    %v1126 = vadd.f32 %v1124, %v1125
    %v1127 = vsel %vm86, %v1076, 0.0
    %v1128 = vsel %vm365, %v1077, 0.0
    %v1129 = vadd.f32 %v1127, %v1128
    %v1130 = vrot.slane %v1129, 4
    %v1131 = vadd.f32 %v1129, %v1130
    %v1132 = vrot.slane %v1131, 2
    %v1133 = vadd.f32 %v1131, %v1132
    %v1134 = vrot.slane %v1133, 1
    %v1135 = vadd.f32 %v1133, %v1134
    %v1136 = vsel %vm86, %v1078, 0.0
    %v1137 = vsel %vm365, %v1079, 0.0
    %v1138 = vadd.f32 %v1136, %v1137
    %v1139 = vrot.slane %v1138, 4
    %v1140 = vadd.f32 %v1138, %v1139
    %v1141 = vrot.slane %v1140, 2
    %v1142 = vadd.f32 %v1140, %v1141
    %v1143 = vrot.slane %v1142, 1
    %v1144 = vadd.f32 %v1142, %v1143
    %v1145 = vsel %vm86, %v1080, 0.0
    %v1146 = vsel %vm365, %v1081, 0.0
    %v1147 = vadd.f32 %v1145, %v1146
    %v1148 = vrot.slane %v1147, 4
    %v1149 = vadd.f32 %v1147, %v1148
    %v1150 = vrot.slane %v1149, 2
    %v1151 = vadd.f32 %v1149, %v1150
    %v1152 = vrot.slane %v1151, 1
    %v1153 = vadd.f32 %v1151, %v1152
    %v1155 = vlaneseq
    %v1156 = vshrl.u32 %v1155, 7
    %v1157 = vsub.s32 0, %v1156
    %v1158 = vrot.slane %v66, %v1157
    %v1160 = vmul.f32 %v1044, %v1158
    %v1169 = vsel %vm782, %v1099, %v1090
    %v1170 = vsel %vm784, %v1108, %v1169
    %v1171 = vsel %vm786, %v1117, %v1170
    %v1172 = vsel %vm788, %v1126, %v1171
    %v1173 = vsel %vm790, %v1135, %v1172
    %v1174 = vsel %vm792, %v1144, %v1173
    %v1175 = vsel %vm794, %v1153, %v1174
    %v1176 = vsel %vm86, %v1175, 0
    %1178 = vmatprep.subr.mxu0 0.0
    %1179 = vmatpush1.msra.mxu0 %v58
    %1180 = vmatprep.subr.mxu0 0.0
    %1181 = vmatpush1.msra.mxu0 %v59
    %1182 = vmatprep.subr.mxu0 0.0
    %1183 = vmatpush1.msra.mxu0 %v60
    %1184 = vmatprep.subr.mxu0 0.0
    %1185 = vmatpush1.msra.mxu0 %v61
    %1186 = vmatprep.subr.mxu0 0.0
    %1187 = vmatpush1.msra.mxu0 0.0
    %1188 = vmatprep.subr.mxu0 0.0
    %1189 = vmatpush1.msra.mxu0 0.0
    %1190 = vmatprep.subr.mxu0 0.0
    %1191 = vmatpush1.msra.mxu0 0.0
    %1192 = vmatprep.subr.mxu0 0.0
    %1193 = vmatpush1.msra.mxu0 0.0
    %1194 = vmatprep.subr.mxu0 0.0
    %1195 = vmatpush1.msra.mxu0 0.0
    %1196 = vmatprep.subr.mxu0 0.0
    %1197 = vmatpush1.msra.mxu0 0.0
    %1198 = vmatprep.subr.mxu0 0.0
    %1199 = vmatpush1.msra.mxu0 0.0
    %1200 = vmatprep.subr.mxu0 0.0
    %1201 = vmatpush1.msra.mxu0 0.0
    %1202 = vmatprep.subr.mxu0 0.0
    %1203 = vmatpush1.msra.mxu0 0.0
    %1204 = vmatprep.subr.mxu0 0.0
    %1205 = vmatpush1.msra.mxu0 0.0
    %1206 = vmatprep.subr.mxu0 0.0
    %1207 = vmatpush1.msra.mxu0 0.0
    %1208 = vmatprep.subr.mxu0 0.0
    %1209 = vmatpush1.msra.mxu0 0.0
    %1210 = vmatprep.subr.mxu0 0.0
    %1211 = vmatpush1.msra.mxu0 0.0
    %1212 = vmatprep.subr.mxu0 0.0
    %1213 = vmatpush1.msra.mxu0 0.0
    %1214 = vmatprep.subr.mxu0 0.0
    %1215 = vmatpush1.msra.mxu0 0.0
    %1216 = vmatprep.subr.mxu0 0.0
    %1217 = vmatpush1.msra.mxu0 0.0
    %1218 = vmatprep.subr.mxu0 0.0
    %1219 = vmatpush1.msra.mxu0 0.0
    %1220 = vmatprep.subr.mxu0 0.0
    %1221 = vmatpush1.msra.mxu0 0.0
    %1222 = vmatprep.subr.mxu0 0.0
    %1223 = vmatpush1.msra.mxu0 0.0
    %1224 = vmatprep.subr.mxu0 0.0
    %1225 = vmatpush1.msra.mxu0 0.0
    %1226 = vmatprep.subr.mxu0 0.0
    %1227 = vmatpush1.msra.mxu0 0.0
    %1228 = vmatprep.subr.mxu0 0.0
    %1229 = vmatpush1.msra.mxu0 0.0
    %1230 = vmatprep.subr.mxu0 0.0
    %1231 = vmatpush1.msra.mxu0 0.0
    %1232 = vmatprep.subr.mxu0 0.0
    %1233 = vmatpush1.msra.mxu0 0.0
    %1234 = vmatprep.subr.mxu0 0.0
    %1235 = vmatpush1.msra.mxu0 0.0
    %1236 = vmatprep.subr.mxu0 0.0
    %1237 = vmatpush1.msra.mxu0 0.0
    %1238 = vmatprep.subr.mxu0 0.0
    %1239 = vmatpush1.msra.mxu0 0.0
    %1240 = vmatprep.subr.mxu0 0.0
    %1241 = vmatpush1.msra.mxu0 0.0
    %1242 = vmatprep.mubr.f32.mxu0 0.0
    %1243 = vmatmul.mubr.f32.gmra.mrb[0].mxu0 %v1176
    %v1244 = vpop.f32.mrb[0].mxu0
    %v1245 = vadd.f32 %v1160, %v1244
    %v1246 = vpop.f32.mrb[0].mxu0
    %1247 = vdwg.mxu0
    %v1248 = vmul.f32 %v1047, %v46
    %v1250 = vsel %vm801, %v897, 0
    %1252 = vmatprep.subr.mxu0 0.0
    %1253 = vmatpush1.msra.mxu0 %v47
    %1254 = vmatprep.subr.mxu0 0.0
    %1255 = vmatpush1.msra.mxu0 0.0
    %1256 = vmatprep.subr.mxu0 0.0
    %1257 = vmatpush1.msra.mxu0 0.0
    %1258 = vmatprep.subr.mxu0 0.0
    %1259 = vmatpush1.msra.mxu0 0.0
    %1260 = vmatprep.subr.mxu0 0.0
    %1261 = vmatpush1.msra.mxu0 0.0
    %1262 = vmatprep.subr.mxu0 0.0
    %1263 = vmatpush1.msra.mxu0 0.0
    %1264 = vmatprep.subr.mxu0 0.0
    %1265 = vmatpush1.msra.mxu0 0.0
    %1266 = vmatprep.subr.mxu0 0.0
    %1267 = vmatpush1.msra.mxu0 0.0
    %1268 = vmatprep.subr.mxu0 0.0
    %1269 = vmatpush1.msra.mxu0 0.0
    %1270 = vmatprep.subr.mxu0 0.0
    %1271 = vmatpush1.msra.mxu0 0.0
    %1272 = vmatprep.subr.mxu0 0.0
    %1273 = vmatpush1.msra.mxu0 0.0
    %1274 = vmatprep.subr.mxu0 0.0
    %1275 = vmatpush1.msra.mxu0 0.0
    %1276 = vmatprep.subr.mxu0 0.0
    %1277 = vmatpush1.msra.mxu0 0.0
    %1278 = vmatprep.subr.mxu0 0.0
    %1279 = vmatpush1.msra.mxu0 0.0
    %1280 = vmatprep.subr.mxu0 0.0
    %1281 = vmatpush1.msra.mxu0 0.0
    %1282 = vmatprep.subr.mxu0 0.0
    %1283 = vmatpush1.msra.mxu0 0.0
    %1284 = vmatprep.subr.mxu0 0.0
    %1285 = vmatpush1.msra.mxu0 0.0
    %1286 = vmatprep.subr.mxu0 0.0
    %1287 = vmatpush1.msra.mxu0 0.0
    %1288 = vmatprep.subr.mxu0 0.0
    %1289 = vmatpush1.msra.mxu0 0.0
    %1290 = vmatprep.subr.mxu0 0.0
    %1291 = vmatpush1.msra.mxu0 0.0
    %1292 = vmatprep.subr.mxu0 0.0
    %1293 = vmatpush1.msra.mxu0 0.0
    %1294 = vmatprep.subr.mxu0 0.0
    %1295 = vmatpush1.msra.mxu0 0.0
    %1296 = vmatprep.subr.mxu0 0.0
    %1297 = vmatpush1.msra.mxu0 0.0
    %1298 = vmatprep.subr.mxu0 0.0
    %1299 = vmatpush1.msra.mxu0 0.0
    %1300 = vmatprep.subr.mxu0 0.0
    %1301 = vmatpush1.msra.mxu0 0.0
    %1302 = vmatprep.subr.mxu0 0.0
    %1303 = vmatpush1.msra.mxu0 0.0
    %1304 = vmatprep.subr.mxu0 0.0
    %1305 = vmatpush1.msra.mxu0 0.0
    %1306 = vmatprep.subr.mxu0 0.0
    %1307 = vmatpush1.msra.mxu0 0.0
    %1308 = vmatprep.subr.mxu0 0.0
    %1309 = vmatpush1.msra.mxu0 0.0
    %1310 = vmatprep.subr.mxu0 0.0
    %1311 = vmatpush1.msra.mxu0 0.0
    %1312 = vmatprep.subr.mxu0 0.0
    %1313 = vmatpush1.msra.mxu0 0.0
    %1314 = vmatprep.subr.mxu0 0.0
    %1315 = vmatpush1.msra.mxu0 0.0
    %1316 = vmatprep.mubr.f32.mxu0 0.0
    %1317 = vmatmul.mubr.f32.gmra.mrb[0].mxu0 %v1250
    %v1318 = vpop.f32.mrb[0].mxu0
    %v1319 = vadd.f32 0.0, %v1318
    %v1320 = vpop.f32.mrb[0].mxu0
    %1321 = vdwg.mxu0
    %v1322 = vadd.f32 %v1248, %v1319
    %v1324 = vlaneseq
    %v1325 = vshrl.u32 %v1324, 7
    %v1326 = vsub.s32 0, %v1325
    %v1327 = vrot.slane %v78, %v1326
    %v1329 = vmul.f32 %v1047, %v1327
    %v1331 = vsel %vm86, %v1322, 0
    %1333 = vmatprep.subr.mxu0 0.0
    %1334 = vmatpush1.msra.mxu0 %v72
    %1335 = vmatprep.subr.mxu0 0.0
    %1336 = vmatpush1.msra.mxu0 %v73
    %1337 = vmatprep.subr.mxu0 0.0
    %1338 = vmatpush1.msra.mxu0 %v74
    %1339 = vmatprep.subr.mxu0 0.0
    %1340 = vmatpush1.msra.mxu0 %v75
    %1341 = vmatprep.subr.mxu0 0.0
    %1342 = vmatpush1.msra.mxu0 0.0
    %1343 = vmatprep.subr.mxu0 0.0
    %1344 = vmatpush1.msra.mxu0 0.0
    %1345 = vmatprep.subr.mxu0 0.0
    %1346 = vmatpush1.msra.mxu0 0.0
    %1347 = vmatprep.subr.mxu0 0.0
    %1348 = vmatpush1.msra.mxu0 0.0
    %1349 = vmatprep.subr.mxu0 0.0
    %1350 = vmatpush1.msra.mxu0 0.0
    %1351 = vmatprep.subr.mxu0 0.0
    %1352 = vmatpush1.msra.mxu0 0.0
    %1353 = vmatprep.subr.mxu0 0.0
    %1354 = vmatpush1.msra.mxu0 0.0
    %1355 = vmatprep.subr.mxu0 0.0
    %1356 = vmatpush1.msra.mxu0 0.0
    %1357 = vmatprep.subr.mxu0 0.0
    %1358 = vmatpush1.msra.mxu0 0.0
    %1359 = vmatprep.subr.mxu0 0.0
    %1360 = vmatpush1.msra.mxu0 0.0
    %1361 = vmatprep.subr.mxu0 0.0
    %1362 = vmatpush1.msra.mxu0 0.0
    %1363 = vmatprep.subr.mxu0 0.0
    %1364 = vmatpush1.msra.mxu0 0.0
    %1365 = vmatprep.subr.mxu0 0.0
    %1366 = vmatpush1.msra.mxu0 0.0
    %1367 = vmatprep.subr.mxu0 0.0
    %1368 = vmatpush1.msra.mxu0 0.0
    %1369 = vmatprep.subr.mxu0 0.0
    %1370 = vmatpush1.msra.mxu0 0.0
    %1371 = vmatprep.subr.mxu0 0.0
    %1372 = vmatpush1.msra.mxu0 0.0
    %1373 = vmatprep.subr.mxu0 0.0
    %1374 = vmatpush1.msra.mxu0 0.0
    %1375 = vmatprep.subr.mxu0 0.0
    %1376 = vmatpush1.msra.mxu0 0.0
    %1377 = vmatprep.subr.mxu0 0.0
    %1378 = vmatpush1.msra.mxu0 0.0
    %1379 = vmatprep.subr.mxu0 0.0
    %1380 = vmatpush1.msra.mxu0 0.0
    %1381 = vmatprep.subr.mxu0 0.0
    %1382 = vmatpush1.msra.mxu0 0.0
    %1383 = vmatprep.subr.mxu0 0.0
    %1384 = vmatpush1.msra.mxu0 0.0
    %1385 = vmatprep.subr.mxu0 0.0
    %1386 = vmatpush1.msra.mxu0 0.0
    %1387 = vmatprep.subr.mxu0 0.0
    %1388 = vmatpush1.msra.mxu0 0.0
    %1389 = vmatprep.subr.mxu0 0.0
    %1390 = vmatpush1.msra.mxu0 0.0
    %1391 = vmatprep.subr.mxu0 0.0
    %1392 = vmatpush1.msra.mxu0 0.0
    %1393 = vmatprep.subr.mxu0 0.0
    %1394 = vmatpush1.msra.mxu0 0.0
    %1395 = vmatprep.subr.mxu0 0.0
    %1396 = vmatpush1.msra.mxu0 0.0
    %1397 = vmatprep.mubr.f32.mxu0 0.0
    %1398 = vmatmul.mubr.f32.gmra.mrb[0].mxu0 %v1331
    %v1399 = vpop.f32.mrb[0].mxu0
    %v1400 = vadd.f32 %v1329, %v1399
    %v1401 = vpop.f32.mrb[0].mxu0
    %1402 = vdwg.mxu0
    %v1403 = vadd.f32 %v1245, %v1400
    %v1404 = vmul.f32 %v1403, %v1049
    %1405 = vst.msk [vmem:[#allocation2] sm:$0xff] %vm86, %v1404
    // Predicated region
    $region34: #{tpu_custom_call.1} parent=1 // pred_check
      _
    $region35: #{tpu_custom_call.1} parent=1 // pred_check_branch
      %1407 = sbr.rel (0) target = $region37
    $region36: #{tpu_custom_call.1} parent=1 // pred_region
      %s1409 = ssub.s32 128, 128
      %1410 = vsyncadd [#allocation3], %s1409
      %s1412 = sshll.u32 [#allocation2], 4
      %s1413 = int_to_ptr.vmem [resolvable:$true] %s1412
      %1415 = dma.vmem_to_hbm [thread:$0]  %s1413, 128, %s8, [#allocation3]
    $region37: #{tpu_custom_call.1} parent=1 // pred_fallthru
      _
    // Predicated region
    $region38: #{tpu_custom_call.1} parent=1 // pred_check
      _
    $region39: #{tpu_custom_call.1} parent=1 // pred_check_branch
      %1417 = sbr.rel (0) target = $region41
    $region40: #{tpu_custom_call.1} parent=1 // pred_region
      %1418 = dma.done [#allocation3], 128
    $region41: #{tpu_custom_call.1} parent=1 // pred_fallthru
      _
    %1419 = vsyncpa [#allocation3], 1

</llo_original>
